<compile_context>
chip_gen: v5e
topology: v5e:2x2
jax: 0.10.0
libtpu: 0.0.40
codegen_flags: <defaults>
</compile_context>

<pallas_src>
import functools

import jax
import jax.numpy as jnp
from jax.experimental import pallas as pl
from jax.experimental.pallas import tpu as pltpu


# ----------------------------------------------------------------------------
# Fused Pallas kernel (all LSTM layers + FC head, grid=(1,), no scratch)
# ----------------------------------------------------------------------------
def _make_fused_lstm_kernel(num_layer, T, B, H):
    """Kernel signature:
       (x2d,
        w_ih0_t, w_hh0_t, bias0,          # layer 0
        [w_cat_l, bias_l] * (num_layer-1),# deeper layers (pre-concatenated W)
        w_fc_row, b_fc,
        out)
    PyTorch gate order: i, f, g, o.
    """

    def kernel(*refs):
        x2d_ref = refs[0]                                  # (T*B, D) time-major
        wih0_ref, whh0_ref, b0_ref = refs[1], refs[2], refs[3]
        idx = 4
        deep_refs = []
        for _ in range(1, num_layer):
            deep_refs.append((refs[idx], refs[idx + 1]))   # (w_cat (2H,4H), bias (1,4H))
            idx += 2
        wfc_ref = refs[idx]                                # (1, H)
        bfc_ref = refs[idx + 1]                            # (1, 1)
        out_ref = refs[idx + 2]                            # (B, 1)

        f32 = jnp.float32

        # ---- Layer 0 hoisted input projection: ONE MXU matmul over all T
        #      timesteps, kept as a vreg-resident value (T*B, 4H).
        gx0 = (
            jnp.dot(x2d_ref[...], wih0_ref[...], preferred_element_type=f32)
            + b0_ref[...]
        )
        whh0 = whh0_ref[...]                               # (H, 4H)
        wcat = [w[...] for (w, _) in deep_refs]            # each (2H, 4H)
        bdeep = [b[...] for (_, b) in deep_refs]           # each (1, 4H)

        def cell(gates, c_prev):
            # Two full-vreg EUP activations on the 4H-wide gates, then slice.
            sg = jax.nn.sigmoid(gates)
            th = jnp.tanh(gates)
            i_g = sg[:, 0 * H:1 * H]
            f_g = sg[:, 1 * H:2 * H]
            g_g = th[:, 2 * H:3 * H]
            o_g = sg[:, 3 * H:4 * H]
            c_new = f_g * c_prev + i_g * g_g
            h_new = o_g * jnp.tanh(c_new)
            return h_new, c_new

        h = [jnp.zeros((B, H), f32) for _ in range(num_layer)]
        c = [jnp.zeros((B, H), f32) for _ in range(num_layer)]

        # ---- Wavefront schedule over (layer, time) anti-diagonals.
        # At step s, layer l processes timestep t = s - l.  Layers are visited
        # deepest-first so layer l reads h[l-1] (layer l-1's output at
        # timestep t, produced at step s-1) before layer l-1 advances to t+1.
        # All per-step states stay in vregs; no VMEM round-trips.
        for s in range(T + num_layer - 1):
            for l in reversed(range(num_layer)):
                t = s - l
                if not (0 <= t < T):
                    continue
                if l == 0:
                    gates = gx0[t * B:(t + 1) * B, :] + jnp.dot(
                        h[0], whh0, preferred_element_type=f32)
                else:
                    # Fused input+hidden projection: one (B,2H)@(2H,4H) matmul.
                    xcat = jnp.concatenate([h[l - 1], h[l]], axis=-1)
                    gates = jnp.dot(
                        xcat, wcat[l - 1], preferred_element_type=f32
                    ) + bdeep[l - 1]
                h[l], c[l] = cell(gates, c[l])

        # ---- FC head on VPU/XLU (avoid a 1-wide MXU matmul / masked store).
        h_last = h[num_layer - 1]                          # == out[:, -1, :]
        out = jnp.sum(h_last * wfc_ref[...], axis=-1, keepdims=True) + bfc_ref[...]
        out_ref[...] = out.astype(out_ref.dtype)

    return kernel


# ----------------------------------------------------------------------------
# Wrapper
# ----------------------------------------------------------------------------
@functools.partial(jax.jit, static_argnames=("num_layer",))
def lstm_forward(params, x, num_layer):
    """x: (B, T, input_size) -> (B, 1), matching LSTM.forward in PyTorch."""
    B, T, D = x.shape
    H = params["layers"][0]["w_hh_t"].shape[0]

    # Time-major flatten so per-timestep slices inside the kernel are
    # contiguous (B)-row blocks of a single 2-D slab.
    x2d = jnp.transpose(x, (1, 0, 2)).reshape(T * B, D)

    p0 = params["layers"][0]
    inputs = [x2d, p0["w_ih_t"], p0["w_hh_t"], p0["bias"]]
    in_specs = [
        pl.BlockSpec((T * B, D), lambda i: (0, 0)),        # x (time-major, flat)
        pl.BlockSpec((D, 4 * H), lambda i: (0, 0)),        # W_ih0^T
        pl.BlockSpec((H, 4 * H), lambda i: (0, 0)),        # W_hh0^T
        pl.BlockSpec((1, 4 * H), lambda i: (0, 0)),        # b_ih0 + b_hh0
    ]
    for layer in range(1, num_layer):
        p = params["layers"][layer]
        inputs += [p["w_cat"], p["bias"]]
        in_specs += [
            pl.BlockSpec((2 * H, 4 * H), lambda i: (0, 0)),  # [W_ih^T ; W_hh^T]
            pl.BlockSpec((1, 4 * H), lambda i: (0, 0)),      # b_ih + b_hh
        ]
    inputs += [params["w_fc_row"], params["b_fc"]]
    in_specs += [
        pl.BlockSpec((1, H), lambda i: (0, 0)),            # fc weight (row)
        pl.BlockSpec((1, 1), lambda i: (0, 0)),            # fc bias
    ]

    kernel = _make_fused_lstm_kernel(num_layer, T, B, H)
    return pl.pallas_call(
        kernel,
        out_shape=jax.ShapeDtypeStruct((B, 1), jnp.float32),
        grid_spec=pltpu.PrefetchScalarGridSpec(
            num_scalar_prefetch=0,
            grid=(1,),
            in_specs=in_specs,
            out_specs=pl.BlockSpec((B, 1), lambda i: (0, 0)),
        ),
        compiler_params=pltpu.CompilerParams(
            dimension_semantics=("arbitrary",),
        ),
    )(*inputs)


def init_params(key, input_size, hidden_size, num_layer):
    """Deterministic params matching nn.LSTM / nn.Linear shapes.

    PyTorch init is U(-1/sqrt(H), 1/sqrt(H)) for LSTM weights and
    U(-1/sqrt(fan_in), 1/sqrt(fan_in)) for Linear; same distributions here.
    For layers >= 1 the input/hidden weights are pre-concatenated so the
    kernel's per-step gates are a single (B, 2H) @ (2H, 4H) matmul.
    """
    params = {"layers": []}
    k = 1.0 / jnp.sqrt(hidden_size)
    for layer in range(num_layer):
        in_dim = input_size if layer == 0 else hidden_size
        key, k1, k2, k3, k4 = jax.random.split(key, 5)
        w_ih = jax.random.uniform(k1, (4 * hidden_size, in_dim), jnp.float32, -k, k)
        w_hh = jax.random.uniform(k2, (4 * hidden_size, hidden_size), jnp.float32, -k, k)
        b_ih = jax.random.uniform(k3, (4 * hidden_size,), jnp.float32, -k, k)
        b_hh = jax.random.uniform(k4, (4 * hidden_size,), jnp.float32, -k, k)
        layer_p = dict(bias=(b_ih + b_hh).reshape(1, 4 * hidden_size))
        if layer == 0:
            layer_p["w_ih_t"] = w_ih.T                    # (in_dim, 4H)
            layer_p["w_hh_t"] = w_hh.T                    # (H, 4H)
        else:
            layer_p["w_cat"] = jnp.concatenate([w_ih.T, w_hh.T], axis=0)  # (2H, 4H)
        params["layers"].append(layer_p)
    key, k5, k6 = jax.random.split(key, 3)
    kf = 1.0 / jnp.sqrt(hidden_size)
    w_fc = jax.random.uniform(k5, (1, hidden_size), jnp.float32, -kf, kf)
    b_fc = jax.random.uniform(k6, (1,), jnp.float32, -kf, kf)
    params["w_fc_row"] = w_fc                             # (1, H)
    params["b_fc"] = b_fc.reshape(1, 1)
    return params


# ----------------------------------------------------------------------------
# Pure-JAX reference (sanity check only)
# ----------------------------------------------------------------------------
def lstm_forward_ref(params, x, num_layer):
    B = x.shape[0]
    h_seq = jnp.transpose(x, (1, 0, 2))                   # (T, B, D)
    for layer in range(num_layer):
        p = params["layers"][layer]
        H = p["bias"].shape[-1] // 4
        if layer == 0:
            w_ih_t, w_hh_t = p["w_ih_t"], p["w_hh_t"]
        else:
            w_ih_t, w_hh_t = p["w_cat"][:H], p["w_cat"][H:]

        def step(carry, x_t, w_ih_t=w_ih_t, w_hh_t=w_hh_t, b=p["bias"], H=H):
            h, c = carry
            gates = x_t @ w_ih_t + h @ w_hh_t + b
            i = jax.nn.sigmoid(gates[:, 0 * H:1 * H])
            f = jax.nn.sigmoid(gates[:, 1 * H:2 * H])
            g = jnp.tanh(gates[:, 2 * H:3 * H])
            o = jax.nn.sigmoid(gates[:, 3 * H:4 * H])
            c = f * c + i * g
            h = o * jnp.tanh(c)
            return (h, c), h

        init = (jnp.zeros((B, H), jnp.float32), jnp.zeros((B, H), jnp.float32))
        _, h_seq = jax.lax.scan(step, init, h_seq)
    return h_seq[-1] @ params["w_fc_row"].T + params["b_fc"]


if __name__ == "__main__":
    batch, seq, input_size, hidden_size, num_layer = 2, 8, 4, 32, 2

    key = jax.random.PRNGKey(0)
    key, kx = jax.random.split(key)
    x = jax.random.normal(kx, (batch, seq, input_size), jnp.float32)

    params = init_params(key, input_size, hidden_size, num_layer)

    out = lstm_forward(params, x, num_layer)
    out = jax.block_until_ready(out)

    ref = lstm_forward_ref(params, x, num_layer)
    assert out.shape == (batch, 1)
    assert jnp.allclose(out, ref, atol=1e-4, rtol=1e-4), (out, ref)

    print("KERNEL_OK")
</pallas_src>

<mosaic_0001>
module attributes {stable_mosaic.version = 11 : i64} {
  func.func @kernel(%arg0: i32, %arg1: memref<16x4xf32, #tpu.memory_space<vmem>>, %arg2: memref<4x128xf32, #tpu.memory_space<vmem>>, %arg3: memref<32x128xf32, #tpu.memory_space<vmem>>, %arg4: memref<1x128xf32, #tpu.memory_space<vmem>>, %arg5: memref<64x128xf32, #tpu.memory_space<vmem>>, %arg6: memref<1x128xf32, #tpu.memory_space<vmem>>, %arg7: memref<1x32xf32, #tpu.memory_space<vmem>>, %arg8: memref<1x1xf32, #tpu.memory_space<vmem>>, %arg9: memref<2x1xf32, #tpu.memory_space<vmem>>) attributes {dimension_semantics = [#tpu.dimension_semantics<arbitrary>], iteration_bounds = array<i64: 1>, scalar_prefetch = 0 : i64, scratch_operands = 0 : i64, tpu.core_type = #tpu.core_type<tc>, window_params = [{pipeline_mode = #tpu.pipeline_mode<synchronous>, transform_indices = @transform_0, window_bounds = array<i64: 16, 4>}, {pipeline_mode = #tpu.pipeline_mode<synchronous>, transform_indices = @transform_1, window_bounds = array<i64: 4, 128>}, {pipeline_mode = #tpu.pipeline_mode<synchronous>, transform_indices = @transform_2, window_bounds = array<i64: 32, 128>}, {pipeline_mode = #tpu.pipeline_mode<synchronous>, transform_indices = @transform_3, window_bounds = array<i64: 1, 128>}, {pipeline_mode = #tpu.pipeline_mode<synchronous>, transform_indices = @transform_4, window_bounds = array<i64: 64, 128>}, {pipeline_mode = #tpu.pipeline_mode<synchronous>, transform_indices = @transform_5, window_bounds = array<i64: 1, 128>}, {pipeline_mode = #tpu.pipeline_mode<synchronous>, transform_indices = @transform_6, window_bounds = array<i64: 1, 32>}, {pipeline_mode = #tpu.pipeline_mode<synchronous>, transform_indices = @transform_7, window_bounds = array<i64: 1, 1>}, {pipeline_mode = #tpu.pipeline_mode<synchronous>, transform_indices = @transform_8, window_bounds = array<i64: 2, 1>}]} {
    %c0 = arith.constant 0 : index
    %c0_0 = arith.constant 0 : index
    %0 = vector.load %arg1[%c0, %c0_0] : memref<16x4xf32, #tpu.memory_space<vmem>>, vector<16x4xf32>
    %c0_1 = arith.constant 0 : index
    %c0_2 = arith.constant 0 : index
    %1 = vector.load %arg2[%c0_1, %c0_2] : memref<4x128xf32, #tpu.memory_space<vmem>>, vector<4x128xf32>
    %cst = arith.constant dense<0.000000e+00> : vector<16x128xf32>
    %2 = tpu.matmul %0, %1, %cst {dimension_numbers = #tpu.dot_dimension_numbers<[1], [0], [0], [1], [0, 0, 1, 1], [], []>} : vector<16x4xf32>, vector<4x128xf32>, vector<16x128xf32> -> vector<16x128xf32>
    %c0_3 = arith.constant 0 : index
    %c0_4 = arith.constant 0 : index
    %3 = vector.load %arg4[%c0_3, %c0_4] : memref<1x128xf32, #tpu.memory_space<vmem>>, vector<1x128xf32>
    %4 = vector.broadcast %3 : vector<1x128xf32> to vector<16x128xf32>
    %5 = arith.addf %2, %4 : vector<16x128xf32>
    %c0_5 = arith.constant 0 : index
    %c0_6 = arith.constant 0 : index
    %6 = vector.load %arg3[%c0_5, %c0_6] : memref<32x128xf32, #tpu.memory_space<vmem>>, vector<32x128xf32>
    %c0_7 = arith.constant 0 : index
    %c0_8 = arith.constant 0 : index
    %7 = vector.load %arg5[%c0_7, %c0_8] : memref<64x128xf32, #tpu.memory_space<vmem>>, vector<64x128xf32>
    %c0_9 = arith.constant 0 : index
    %c0_10 = arith.constant 0 : index
    %8 = vector.load %arg6[%c0_9, %c0_10] : memref<1x128xf32, #tpu.memory_space<vmem>>, vector<1x128xf32>
    %cst_11 = arith.constant 0.000000e+00 : f32
    %9 = vector.broadcast %cst_11 : f32 to vector<2x32xf32>
    %cst_12 = arith.constant 0.000000e+00 : f32
    %10 = vector.broadcast %cst_12 : f32 to vector<2x32xf32>
    %cst_13 = arith.constant 0.000000e+00 : f32
    %11 = vector.broadcast %cst_13 : f32 to vector<2x32xf32>
    %cst_14 = arith.constant 0.000000e+00 : f32
    %12 = vector.broadcast %cst_14 : f32 to vector<2x32xf32>
    %13 = vector.extract_strided_slice %5 {offsets = [0, 0], sizes = [2, 128], strides = [1, 1]} : vector<16x128xf32> to vector<2x128xf32>
    %cst_15 = arith.constant dense<0.000000e+00> : vector<2x128xf32>
    %14 = tpu.matmul %9, %6, %cst_15 {dimension_numbers = #tpu.dot_dimension_numbers<[1], [0], [0], [1], [0, 0, 1, 1], [], []>} : vector<2x32xf32>, vector<32x128xf32>, vector<2x128xf32> -> vector<2x128xf32>
    %15 = arith.addf %13, %14 : vector<2x128xf32>
    %16 = arith.negf %15 : vector<2x128xf32>
    %17 = math.exp %16 : vector<2x128xf32>
    %cst_16 = arith.constant 1.000000e+00 : f32
    %18 = vector.broadcast %cst_16 : f32 to vector<2x128xf32>
    %19 = arith.addf %18, %17 : vector<2x128xf32>
    %20 = arith.divf %18, %19 : vector<2x128xf32>
    %21 = math.tanh %15 : vector<2x128xf32>
    %22 = vector.extract_strided_slice %20 {offsets = [0, 0], sizes = [2, 32], strides = [1, 1]} : vector<2x128xf32> to vector<2x32xf32>
    %23 = vector.extract_strided_slice %20 {offsets = [0, 32], sizes = [2, 32], strides = [1, 1]} : vector<2x128xf32> to vector<2x32xf32>
    %24 = vector.extract_strided_slice %21 {offsets = [0, 64], sizes = [2, 32], strides = [1, 1]} : vector<2x128xf32> to vector<2x32xf32>
    %25 = vector.extract_strided_slice %20 {offsets = [0, 96], sizes = [2, 32], strides = [1, 1]} : vector<2x128xf32> to vector<2x32xf32>
    %26 = arith.mulf %23, %11 : vector<2x32xf32>
    %27 = arith.mulf %22, %24 : vector<2x32xf32>
    %28 = arith.addf %26, %27 : vector<2x32xf32>
    %29 = math.tanh %28 : vector<2x32xf32>
    %30 = arith.mulf %25, %29 : vector<2x32xf32>
    %31 = tpu.concatenate %30, %10 in 1 : vector<2x32xf32>, vector<2x32xf32> -> vector<2x64xf32>
    %cst_17 = arith.constant dense<0.000000e+00> : vector<2x128xf32>
    %32 = tpu.matmul %31, %7, %cst_17 {dimension_numbers = #tpu.dot_dimension_numbers<[1], [0], [0], [1], [0, 0, 1, 1], [], []>} : vector<2x64xf32>, vector<64x128xf32>, vector<2x128xf32> -> vector<2x128xf32>
    %33 = vector.broadcast %8 : vector<1x128xf32> to vector<2x128xf32>
    %34 = arith.addf %32, %33 : vector<2x128xf32>
    %35 = arith.negf %34 : vector<2x128xf32>
    %36 = math.exp %35 : vector<2x128xf32>
    %cst_18 = arith.constant 1.000000e+00 : f32
    %37 = vector.broadcast %cst_18 : f32 to vector<2x128xf32>
    %38 = arith.addf %37, %36 : vector<2x128xf32>
    %39 = arith.divf %37, %38 : vector<2x128xf32>
    %40 = math.tanh %34 : vector<2x128xf32>
    %41 = vector.extract_strided_slice %39 {offsets = [0, 0], sizes = [2, 32], strides = [1, 1]} : vector<2x128xf32> to vector<2x32xf32>
    %42 = vector.extract_strided_slice %39 {offsets = [0, 32], sizes = [2, 32], strides = [1, 1]} : vector<2x128xf32> to vector<2x32xf32>
    %43 = vector.extract_strided_slice %40 {offsets = [0, 64], sizes = [2, 32], strides = [1, 1]} : vector<2x128xf32> to vector<2x32xf32>
    %44 = vector.extract_strided_slice %39 {offsets = [0, 96], sizes = [2, 32], strides = [1, 1]} : vector<2x128xf32> to vector<2x32xf32>
    %45 = arith.mulf %42, %12 : vector<2x32xf32>
    %46 = arith.mulf %41, %43 : vector<2x32xf32>
    %47 = arith.addf %45, %46 : vector<2x32xf32>
    %48 = math.tanh %47 : vector<2x32xf32>
    %49 = arith.mulf %44, %48 : vector<2x32xf32>
    %50 = vector.extract_strided_slice %5 {offsets = [2, 0], sizes = [2, 128], strides = [1, 1]} : vector<16x128xf32> to vector<2x128xf32>
    %cst_19 = arith.constant dense<0.000000e+00> : vector<2x128xf32>
    %51 = tpu.matmul %30, %6, %cst_19 {dimension_numbers = #tpu.dot_dimension_numbers<[1], [0], [0], [1], [0, 0, 1, 1], [], []>} : vector<2x32xf32>, vector<32x128xf32>, vector<2x128xf32> -> vector<2x128xf32>
    %52 = arith.addf %50, %51 : vector<2x128xf32>
    %53 = arith.negf %52 : vector<2x128xf32>
    %54 = math.exp %53 : vector<2x128xf32>
    %cst_20 = arith.constant 1.000000e+00 : f32
    %55 = vector.broadcast %cst_20 : f32 to vector<2x128xf32>
    %56 = arith.addf %55, %54 : vector<2x128xf32>
    %57 = arith.divf %55, %56 : vector<2x128xf32>
    %58 = math.tanh %52 : vector<2x128xf32>
    %59 = vector.extract_strided_slice %57 {offsets = [0, 0], sizes = [2, 32], strides = [1, 1]} : vector<2x128xf32> to vector<2x32xf32>
    %60 = vector.extract_strided_slice %57 {offsets = [0, 32], sizes = [2, 32], strides = [1, 1]} : vector<2x128xf32> to vector<2x32xf32>
    %61 = vector.extract_strided_slice %58 {offsets = [0, 64], sizes = [2, 32], strides = [1, 1]} : vector<2x128xf32> to vector<2x32xf32>
    %62 = vector.extract_strided_slice %57 {offsets = [0, 96], sizes = [2, 32], strides = [1, 1]} : vector<2x128xf32> to vector<2x32xf32>
    %63 = arith.mulf %60, %28 : vector<2x32xf32>
    %64 = arith.mulf %59, %61 : vector<2x32xf32>
    %65 = arith.addf %63, %64 : vector<2x32xf32>
    %66 = math.tanh %65 : vector<2x32xf32>
    %67 = arith.mulf %62, %66 : vector<2x32xf32>
    %68 = tpu.concatenate %67, %49 in 1 : vector<2x32xf32>, vector<2x32xf32> -> vector<2x64xf32>
    %cst_21 = arith.constant dense<0.000000e+00> : vector<2x128xf32>
    %69 = tpu.matmul %68, %7, %cst_21 {dimension_numbers = #tpu.dot_dimension_numbers<[1], [0], [0], [1], [0, 0, 1, 1], [], []>} : vector<2x64xf32>, vector<64x128xf32>, vector<2x128xf32> -> vector<2x128xf32>
    %70 = vector.broadcast %8 : vector<1x128xf32> to vector<2x128xf32>
    %71 = arith.addf %69, %70 : vector<2x128xf32>
    %72 = arith.negf %71 : vector<2x128xf32>
    %73 = math.exp %72 : vector<2x128xf32>
    %cst_22 = arith.constant 1.000000e+00 : f32
    %74 = vector.broadcast %cst_22 : f32 to vector<2x128xf32>
    %75 = arith.addf %74, %73 : vector<2x128xf32>
    %76 = arith.divf %74, %75 : vector<2x128xf32>
    %77 = math.tanh %71 : vector<2x128xf32>
    %78 = vector.extract_strided_slice %76 {offsets = [0, 0], sizes = [2, 32], strides = [1, 1]} : vector<2x128xf32> to vector<2x32xf32>
    %79 = vector.extract_strided_slice %76 {offsets = [0, 32], sizes = [2, 32], strides = [1, 1]} : vector<2x128xf32> to vector<2x32xf32>
    %80 = vector.extract_strided_slice %77 {offsets = [0, 64], sizes = [2, 32], strides = [1, 1]} : vector<2x128xf32> to vector<2x32xf32>
    %81 = vector.extract_strided_slice %76 {offsets = [0, 96], sizes = [2, 32], strides = [1, 1]} : vector<2x128xf32> to vector<2x32xf32>
    %82 = arith.mulf %79, %47 : vector<2x32xf32>
    %83 = arith.mulf %78, %80 : vector<2x32xf32>
    %84 = arith.addf %82, %83 : vector<2x32xf32>
    %85 = math.tanh %84 : vector<2x32xf32>
    %86 = arith.mulf %81, %85 : vector<2x32xf32>
    %87 = vector.extract_strided_slice %5 {offsets = [4, 0], sizes = [2, 128], strides = [1, 1]} : vector<16x128xf32> to vector<2x128xf32>
    %cst_23 = arith.constant dense<0.000000e+00> : vector<2x128xf32>
    %88 = tpu.matmul %67, %6, %cst_23 {dimension_numbers = #tpu.dot_dimension_numbers<[1], [0], [0], [1], [0, 0, 1, 1], [], []>} : vector<2x32xf32>, vector<32x128xf32>, vector<2x128xf32> -> vector<2x128xf32>
    %89 = arith.addf %87, %88 : vector<2x128xf32>
    %90 = arith.negf %89 : vector<2x128xf32>
    %91 = math.exp %90 : vector<2x128xf32>
    %cst_24 = arith.constant 1.000000e+00 : f32
    %92 = vector.broadcast %cst_24 : f32 to vector<2x128xf32>
    %93 = arith.addf %92, %91 : vector<2x128xf32>
    %94 = arith.divf %92, %93 : vector<2x128xf32>
    %95 = math.tanh %89 : vector<2x128xf32>
    %96 = vector.extract_strided_slice %94 {offsets = [0, 0], sizes = [2, 32], strides = [1, 1]} : vector<2x128xf32> to vector<2x32xf32>
    %97 = vector.extract_strided_slice %94 {offsets = [0, 32], sizes = [2, 32], strides = [1, 1]} : vector<2x128xf32> to vector<2x32xf32>
    %98 = vector.extract_strided_slice %95 {offsets = [0, 64], sizes = [2, 32], strides = [1, 1]} : vector<2x128xf32> to vector<2x32xf32>
    %99 = vector.extract_strided_slice %94 {offsets = [0, 96], sizes = [2, 32], strides = [1, 1]} : vector<2x128xf32> to vector<2x32xf32>
    %100 = arith.mulf %97, %65 : vector<2x32xf32>
    %101 = arith.mulf %96, %98 : vector<2x32xf32>
    %102 = arith.addf %100, %101 : vector<2x32xf32>
    %103 = math.tanh %102 : vector<2x32xf32>
    %104 = arith.mulf %99, %103 : vector<2x32xf32>
    %105 = tpu.concatenate %104, %86 in 1 : vector<2x32xf32>, vector<2x32xf32> -> vector<2x64xf32>
    %cst_25 = arith.constant dense<0.000000e+00> : vector<2x128xf32>
    %106 = tpu.matmul %105, %7, %cst_25 {dimension_numbers = #tpu.dot_dimension_numbers<[1], [0], [0], [1], [0, 0, 1, 1], [], []>} : vector<2x64xf32>, vector<64x128xf32>, vector<2x128xf32> -> vector<2x128xf32>
    %107 = vector.broadcast %8 : vector<1x128xf32> to vector<2x128xf32>
    %108 = arith.addf %106, %107 : vector<2x128xf32>
    %109 = arith.negf %108 : vector<2x128xf32>
    %110 = math.exp %109 : vector<2x128xf32>
    %cst_26 = arith.constant 1.000000e+00 : f32
    %111 = vector.broadcast %cst_26 : f32 to vector<2x128xf32>
    %112 = arith.addf %111, %110 : vector<2x128xf32>
    %113 = arith.divf %111, %112 : vector<2x128xf32>
    %114 = math.tanh %108 : vector<2x128xf32>
    %115 = vector.extract_strided_slice %113 {offsets = [0, 0], sizes = [2, 32], strides = [1, 1]} : vector<2x128xf32> to vector<2x32xf32>
    %116 = vector.extract_strided_slice %113 {offsets = [0, 32], sizes = [2, 32], strides = [1, 1]} : vector<2x128xf32> to vector<2x32xf32>
    %117 = vector.extract_strided_slice %114 {offsets = [0, 64], sizes = [2, 32], strides = [1, 1]} : vector<2x128xf32> to vector<2x32xf32>
    %118 = vector.extract_strided_slice %113 {offsets = [0, 96], sizes = [2, 32], strides = [1, 1]} : vector<2x128xf32> to vector<2x32xf32>
    %119 = arith.mulf %116, %84 : vector<2x32xf32>
    %120 = arith.mulf %115, %117 : vector<2x32xf32>
    %121 = arith.addf %119, %120 : vector<2x32xf32>
    %122 = math.tanh %121 : vector<2x32xf32>
    %123 = arith.mulf %118, %122 : vector<2x32xf32>
    %124 = vector.extract_strided_slice %5 {offsets = [6, 0], sizes = [2, 128], strides = [1, 1]} : vector<16x128xf32> to vector<2x128xf32>
    %cst_27 = arith.constant dense<0.000000e+00> : vector<2x128xf32>
    %125 = tpu.matmul %104, %6, %cst_27 {dimension_numbers = #tpu.dot_dimension_numbers<[1], [0], [0], [1], [0, 0, 1, 1], [], []>} : vector<2x32xf32>, vector<32x128xf32>, vector<2x128xf32> -> vector<2x128xf32>
    %126 = arith.addf %124, %125 : vector<2x128xf32>
    %127 = arith.negf %126 : vector<2x128xf32>
    %128 = math.exp %127 : vector<2x128xf32>
    %cst_28 = arith.constant 1.000000e+00 : f32
    %129 = vector.broadcast %cst_28 : f32 to vector<2x128xf32>
    %130 = arith.addf %129, %128 : vector<2x128xf32>
    %131 = arith.divf %129, %130 : vector<2x128xf32>
    %132 = math.tanh %126 : vector<2x128xf32>
    %133 = vector.extract_strided_slice %131 {offsets = [0, 0], sizes = [2, 32], strides = [1, 1]} : vector<2x128xf32> to vector<2x32xf32>
    %134 = vector.extract_strided_slice %131 {offsets = [0, 32], sizes = [2, 32], strides = [1, 1]} : vector<2x128xf32> to vector<2x32xf32>
    %135 = vector.extract_strided_slice %132 {offsets = [0, 64], sizes = [2, 32], strides = [1, 1]} : vector<2x128xf32> to vector<2x32xf32>
    %136 = vector.extract_strided_slice %131 {offsets = [0, 96], sizes = [2, 32], strides = [1, 1]} : vector<2x128xf32> to vector<2x32xf32>
    %137 = arith.mulf %134, %102 : vector<2x32xf32>
    %138 = arith.mulf %133, %135 : vector<2x32xf32>
    %139 = arith.addf %137, %138 : vector<2x32xf32>
    %140 = math.tanh %139 : vector<2x32xf32>
    %141 = arith.mulf %136, %140 : vector<2x32xf32>
    %142 = tpu.concatenate %141, %123 in 1 : vector<2x32xf32>, vector<2x32xf32> -> vector<2x64xf32>
    %cst_29 = arith.constant dense<0.000000e+00> : vector<2x128xf32>
    %143 = tpu.matmul %142, %7, %cst_29 {dimension_numbers = #tpu.dot_dimension_numbers<[1], [0], [0], [1], [0, 0, 1, 1], [], []>} : vector<2x64xf32>, vector<64x128xf32>, vector<2x128xf32> -> vector<2x128xf32>
    %144 = vector.broadcast %8 : vector<1x128xf32> to vector<2x128xf32>
    %145 = arith.addf %143, %144 : vector<2x128xf32>
    %146 = arith.negf %145 : vector<2x128xf32>
    %147 = math.exp %146 : vector<2x128xf32>
    %cst_30 = arith.constant 1.000000e+00 : f32
    %148 = vector.broadcast %cst_30 : f32 to vector<2x128xf32>
    %149 = arith.addf %148, %147 : vector<2x128xf32>
    %150 = arith.divf %148, %149 : vector<2x128xf32>
    %151 = math.tanh %145 : vector<2x128xf32>
    %152 = vector.extract_strided_slice %150 {offsets = [0, 0], sizes = [2, 32], strides = [1, 1]} : vector<2x128xf32> to vector<2x32xf32>
    %153 = vector.extract_strided_slice %150 {offsets = [0, 32], sizes = [2, 32], strides = [1, 1]} : vector<2x128xf32> to vector<2x32xf32>
    %154 = vector.extract_strided_slice %151 {offsets = [0, 64], sizes = [2, 32], strides = [1, 1]} : vector<2x128xf32> to vector<2x32xf32>
    %155 = vector.extract_strided_slice %150 {offsets = [0, 96], sizes = [2, 32], strides = [1, 1]} : vector<2x128xf32> to vector<2x32xf32>
    %156 = arith.mulf %153, %121 : vector<2x32xf32>
    %157 = arith.mulf %152, %154 : vector<2x32xf32>
    %158 = arith.addf %156, %157 : vector<2x32xf32>
    %159 = math.tanh %158 : vector<2x32xf32>
    %160 = arith.mulf %155, %159 : vector<2x32xf32>
    %161 = vector.extract_strided_slice %5 {offsets = [8, 0], sizes = [2, 128], strides = [1, 1]} : vector<16x128xf32> to vector<2x128xf32>
    %cst_31 = arith.constant dense<0.000000e+00> : vector<2x128xf32>
    %162 = tpu.matmul %141, %6, %cst_31 {dimension_numbers = #tpu.dot_dimension_numbers<[1], [0], [0], [1], [0, 0, 1, 1], [], []>} : vector<2x32xf32>, vector<32x128xf32>, vector<2x128xf32> -> vector<2x128xf32>
    %163 = arith.addf %161, %162 : vector<2x128xf32>
    %164 = arith.negf %163 : vector<2x128xf32>
    %165 = math.exp %164 : vector<2x128xf32>
    %cst_32 = arith.constant 1.000000e+00 : f32
    %166 = vector.broadcast %cst_32 : f32 to vector<2x128xf32>
    %167 = arith.addf %166, %165 : vector<2x128xf32>
    %168 = arith.divf %166, %167 : vector<2x128xf32>
    %169 = math.tanh %163 : vector<2x128xf32>
    %170 = vector.extract_strided_slice %168 {offsets = [0, 0], sizes = [2, 32], strides = [1, 1]} : vector<2x128xf32> to vector<2x32xf32>
    %171 = vector.extract_strided_slice %168 {offsets = [0, 32], sizes = [2, 32], strides = [1, 1]} : vector<2x128xf32> to vector<2x32xf32>
    %172 = vector.extract_strided_slice %169 {offsets = [0, 64], sizes = [2, 32], strides = [1, 1]} : vector<2x128xf32> to vector<2x32xf32>
    %173 = vector.extract_strided_slice %168 {offsets = [0, 96], sizes = [2, 32], strides = [1, 1]} : vector<2x128xf32> to vector<2x32xf32>
    %174 = arith.mulf %171, %139 : vector<2x32xf32>
    %175 = arith.mulf %170, %172 : vector<2x32xf32>
    %176 = arith.addf %174, %175 : vector<2x32xf32>
    %177 = math.tanh %176 : vector<2x32xf32>
    %178 = arith.mulf %173, %177 : vector<2x32xf32>
    %179 = tpu.concatenate %178, %160 in 1 : vector<2x32xf32>, vector<2x32xf32> -> vector<2x64xf32>
    %cst_33 = arith.constant dense<0.000000e+00> : vector<2x128xf32>
    %180 = tpu.matmul %179, %7, %cst_33 {dimension_numbers = #tpu.dot_dimension_numbers<[1], [0], [0], [1], [0, 0, 1, 1], [], []>} : vector<2x64xf32>, vector<64x128xf32>, vector<2x128xf32> -> vector<2x128xf32>
    %181 = vector.broadcast %8 : vector<1x128xf32> to vector<2x128xf32>
    %182 = arith.addf %180, %181 : vector<2x128xf32>
    %183 = arith.negf %182 : vector<2x128xf32>
    %184 = math.exp %183 : vector<2x128xf32>
    %cst_34 = arith.constant 1.000000e+00 : f32
    %185 = vector.broadcast %cst_34 : f32 to vector<2x128xf32>
    %186 = arith.addf %185, %184 : vector<2x128xf32>
    %187 = arith.divf %185, %186 : vector<2x128xf32>
    %188 = math.tanh %182 : vector<2x128xf32>
    %189 = vector.extract_strided_slice %187 {offsets = [0, 0], sizes = [2, 32], strides = [1, 1]} : vector<2x128xf32> to vector<2x32xf32>
    %190 = vector.extract_strided_slice %187 {offsets = [0, 32], sizes = [2, 32], strides = [1, 1]} : vector<2x128xf32> to vector<2x32xf32>
    %191 = vector.extract_strided_slice %188 {offsets = [0, 64], sizes = [2, 32], strides = [1, 1]} : vector<2x128xf32> to vector<2x32xf32>
    %192 = vector.extract_strided_slice %187 {offsets = [0, 96], sizes = [2, 32], strides = [1, 1]} : vector<2x128xf32> to vector<2x32xf32>
    %193 = arith.mulf %190, %158 : vector<2x32xf32>
    %194 = arith.mulf %189, %191 : vector<2x32xf32>
    %195 = arith.addf %193, %194 : vector<2x32xf32>
    %196 = math.tanh %195 : vector<2x32xf32>
    %197 = arith.mulf %192, %196 : vector<2x32xf32>
    %198 = vector.extract_strided_slice %5 {offsets = [10, 0], sizes = [2, 128], strides = [1, 1]} : vector<16x128xf32> to vector<2x128xf32>
    %cst_35 = arith.constant dense<0.000000e+00> : vector<2x128xf32>
    %199 = tpu.matmul %178, %6, %cst_35 {dimension_numbers = #tpu.dot_dimension_numbers<[1], [0], [0], [1], [0, 0, 1, 1], [], []>} : vector<2x32xf32>, vector<32x128xf32>, vector<2x128xf32> -> vector<2x128xf32>
    %200 = arith.addf %198, %199 : vector<2x128xf32>
    %201 = arith.negf %200 : vector<2x128xf32>
    %202 = math.exp %201 : vector<2x128xf32>
    %cst_36 = arith.constant 1.000000e+00 : f32
    %203 = vector.broadcast %cst_36 : f32 to vector<2x128xf32>
    %204 = arith.addf %203, %202 : vector<2x128xf32>
    %205 = arith.divf %203, %204 : vector<2x128xf32>
    %206 = math.tanh %200 : vector<2x128xf32>
    %207 = vector.extract_strided_slice %205 {offsets = [0, 0], sizes = [2, 32], strides = [1, 1]} : vector<2x128xf32> to vector<2x32xf32>
    %208 = vector.extract_strided_slice %205 {offsets = [0, 32], sizes = [2, 32], strides = [1, 1]} : vector<2x128xf32> to vector<2x32xf32>
    %209 = vector.extract_strided_slice %206 {offsets = [0, 64], sizes = [2, 32], strides = [1, 1]} : vector<2x128xf32> to vector<2x32xf32>
    %210 = vector.extract_strided_slice %205 {offsets = [0, 96], sizes = [2, 32], strides = [1, 1]} : vector<2x128xf32> to vector<2x32xf32>
    %211 = arith.mulf %208, %176 : vector<2x32xf32>
    %212 = arith.mulf %207, %209 : vector<2x32xf32>
    %213 = arith.addf %211, %212 : vector<2x32xf32>
    %214 = math.tanh %213 : vector<2x32xf32>
    %215 = arith.mulf %210, %214 : vector<2x32xf32>
    %216 = tpu.concatenate %215, %197 in 1 : vector<2x32xf32>, vector<2x32xf32> -> vector<2x64xf32>
    %cst_37 = arith.constant dense<0.000000e+00> : vector<2x128xf32>
    %217 = tpu.matmul %216, %7, %cst_37 {dimension_numbers = #tpu.dot_dimension_numbers<[1], [0], [0], [1], [0, 0, 1, 1], [], []>} : vector<2x64xf32>, vector<64x128xf32>, vector<2x128xf32> -> vector<2x128xf32>
    %218 = vector.broadcast %8 : vector<1x128xf32> to vector<2x128xf32>
    %219 = arith.addf %217, %218 : vector<2x128xf32>
    %220 = arith.negf %219 : vector<2x128xf32>
    %221 = math.exp %220 : vector<2x128xf32>
    %cst_38 = arith.constant 1.000000e+00 : f32
    %222 = vector.broadcast %cst_38 : f32 to vector<2x128xf32>
    %223 = arith.addf %222, %221 : vector<2x128xf32>
    %224 = arith.divf %222, %223 : vector<2x128xf32>
    %225 = math.tanh %219 : vector<2x128xf32>
    %226 = vector.extract_strided_slice %224 {offsets = [0, 0], sizes = [2, 32], strides = [1, 1]} : vector<2x128xf32> to vector<2x32xf32>
    %227 = vector.extract_strided_slice %224 {offsets = [0, 32], sizes = [2, 32], strides = [1, 1]} : vector<2x128xf32> to vector<2x32xf32>
    %228 = vector.extract_strided_slice %225 {offsets = [0, 64], sizes = [2, 32], strides = [1, 1]} : vector<2x128xf32> to vector<2x32xf32>
    %229 = vector.extract_strided_slice %224 {offsets = [0, 96], sizes = [2, 32], strides = [1, 1]} : vector<2x128xf32> to vector<2x32xf32>
    %230 = arith.mulf %227, %195 : vector<2x32xf32>
    %231 = arith.mulf %226, %228 : vector<2x32xf32>
    %232 = arith.addf %230, %231 : vector<2x32xf32>
    %233 = math.tanh %232 : vector<2x32xf32>
    %234 = arith.mulf %229, %233 : vector<2x32xf32>
    %235 = vector.extract_strided_slice %5 {offsets = [12, 0], sizes = [2, 128], strides = [1, 1]} : vector<16x128xf32> to vector<2x128xf32>
    %cst_39 = arith.constant dense<0.000000e+00> : vector<2x128xf32>
    %236 = tpu.matmul %215, %6, %cst_39 {dimension_numbers = #tpu.dot_dimension_numbers<[1], [0], [0], [1], [0, 0, 1, 1], [], []>} : vector<2x32xf32>, vector<32x128xf32>, vector<2x128xf32> -> vector<2x128xf32>
    %237 = arith.addf %235, %236 : vector<2x128xf32>
    %238 = arith.negf %237 : vector<2x128xf32>
    %239 = math.exp %238 : vector<2x128xf32>
    %cst_40 = arith.constant 1.000000e+00 : f32
    %240 = vector.broadcast %cst_40 : f32 to vector<2x128xf32>
    %241 = arith.addf %240, %239 : vector<2x128xf32>
    %242 = arith.divf %240, %241 : vector<2x128xf32>
    %243 = math.tanh %237 : vector<2x128xf32>
    %244 = vector.extract_strided_slice %242 {offsets = [0, 0], sizes = [2, 32], strides = [1, 1]} : vector<2x128xf32> to vector<2x32xf32>
    %245 = vector.extract_strided_slice %242 {offsets = [0, 32], sizes = [2, 32], strides = [1, 1]} : vector<2x128xf32> to vector<2x32xf32>
    %246 = vector.extract_strided_slice %243 {offsets = [0, 64], sizes = [2, 32], strides = [1, 1]} : vector<2x128xf32> to vector<2x32xf32>
    %247 = vector.extract_strided_slice %242 {offsets = [0, 96], sizes = [2, 32], strides = [1, 1]} : vector<2x128xf32> to vector<2x32xf32>
    %248 = arith.mulf %245, %213 : vector<2x32xf32>
    %249 = arith.mulf %244, %246 : vector<2x32xf32>
    %250 = arith.addf %248, %249 : vector<2x32xf32>
    %251 = math.tanh %250 : vector<2x32xf32>
    %252 = arith.mulf %247, %251 : vector<2x32xf32>
    %253 = tpu.concatenate %252, %234 in 1 : vector<2x32xf32>, vector<2x32xf32> -> vector<2x64xf32>
    %cst_41 = arith.constant dense<0.000000e+00> : vector<2x128xf32>
    %254 = tpu.matmul %253, %7, %cst_41 {dimension_numbers = #tpu.dot_dimension_numbers<[1], [0], [0], [1], [0, 0, 1, 1], [], []>} : vector<2x64xf32>, vector<64x128xf32>, vector<2x128xf32> -> vector<2x128xf32>
    %255 = vector.broadcast %8 : vector<1x128xf32> to vector<2x128xf32>
    %256 = arith.addf %254, %255 : vector<2x128xf32>
    %257 = arith.negf %256 : vector<2x128xf32>
    %258 = math.exp %257 : vector<2x128xf32>
    %cst_42 = arith.constant 1.000000e+00 : f32
    %259 = vector.broadcast %cst_42 : f32 to vector<2x128xf32>
    %260 = arith.addf %259, %258 : vector<2x128xf32>
    %261 = arith.divf %259, %260 : vector<2x128xf32>
    %262 = math.tanh %256 : vector<2x128xf32>
    %263 = vector.extract_strided_slice %261 {offsets = [0, 0], sizes = [2, 32], strides = [1, 1]} : vector<2x128xf32> to vector<2x32xf32>
    %264 = vector.extract_strided_slice %261 {offsets = [0, 32], sizes = [2, 32], strides = [1, 1]} : vector<2x128xf32> to vector<2x32xf32>
    %265 = vector.extract_strided_slice %262 {offsets = [0, 64], sizes = [2, 32], strides = [1, 1]} : vector<2x128xf32> to vector<2x32xf32>
    %266 = vector.extract_strided_slice %261 {offsets = [0, 96], sizes = [2, 32], strides = [1, 1]} : vector<2x128xf32> to vector<2x32xf32>
    %267 = arith.mulf %264, %232 : vector<2x32xf32>
    %268 = arith.mulf %263, %265 : vector<2x32xf32>
    %269 = arith.addf %267, %268 : vector<2x32xf32>
    %270 = math.tanh %269 : vector<2x32xf32>
    %271 = arith.mulf %266, %270 : vector<2x32xf32>
    %272 = vector.extract_strided_slice %5 {offsets = [14, 0], sizes = [2, 128], strides = [1, 1]} : vector<16x128xf32> to vector<2x128xf32>
    %cst_43 = arith.constant dense<0.000000e+00> : vector<2x128xf32>
    %273 = tpu.matmul %252, %6, %cst_43 {dimension_numbers = #tpu.dot_dimension_numbers<[1], [0], [0], [1], [0, 0, 1, 1], [], []>} : vector<2x32xf32>, vector<32x128xf32>, vector<2x128xf32> -> vector<2x128xf32>
    %274 = arith.addf %272, %273 : vector<2x128xf32>
    %275 = arith.negf %274 : vector<2x128xf32>
    %276 = math.exp %275 : vector<2x128xf32>
    %cst_44 = arith.constant 1.000000e+00 : f32
    %277 = vector.broadcast %cst_44 : f32 to vector<2x128xf32>
    %278 = arith.addf %277, %276 : vector<2x128xf32>
    %279 = arith.divf %277, %278 : vector<2x128xf32>
    %280 = math.tanh %274 : vector<2x128xf32>
    %281 = vector.extract_strided_slice %279 {offsets = [0, 0], sizes = [2, 32], strides = [1, 1]} : vector<2x128xf32> to vector<2x32xf32>
    %282 = vector.extract_strided_slice %279 {offsets = [0, 32], sizes = [2, 32], strides = [1, 1]} : vector<2x128xf32> to vector<2x32xf32>
    %283 = vector.extract_strided_slice %280 {offsets = [0, 64], sizes = [2, 32], strides = [1, 1]} : vector<2x128xf32> to vector<2x32xf32>
    %284 = vector.extract_strided_slice %279 {offsets = [0, 96], sizes = [2, 32], strides = [1, 1]} : vector<2x128xf32> to vector<2x32xf32>
    %285 = arith.mulf %282, %250 : vector<2x32xf32>
    %286 = arith.mulf %281, %283 : vector<2x32xf32>
    %287 = arith.addf %285, %286 : vector<2x32xf32>
    %288 = math.tanh %287 : vector<2x32xf32>
    %289 = arith.mulf %284, %288 : vector<2x32xf32>
    %290 = tpu.concatenate %289, %271 in 1 : vector<2x32xf32>, vector<2x32xf32> -> vector<2x64xf32>
    %cst_45 = arith.constant dense<0.000000e+00> : vector<2x128xf32>
    %291 = tpu.matmul %290, %7, %cst_45 {dimension_numbers = #tpu.dot_dimension_numbers<[1], [0], [0], [1], [0, 0, 1, 1], [], []>} : vector<2x64xf32>, vector<64x128xf32>, vector<2x128xf32> -> vector<2x128xf32>
    %292 = vector.broadcast %8 : vector<1x128xf32> to vector<2x128xf32>
    %293 = arith.addf %291, %292 : vector<2x128xf32>
    %294 = arith.negf %293 : vector<2x128xf32>
    %295 = math.exp %294 : vector<2x128xf32>
    %cst_46 = arith.constant 1.000000e+00 : f32
    %296 = vector.broadcast %cst_46 : f32 to vector<2x128xf32>
    %297 = arith.addf %296, %295 : vector<2x128xf32>
    %298 = arith.divf %296, %297 : vector<2x128xf32>
    %299 = math.tanh %293 : vector<2x128xf32>
    %300 = vector.extract_strided_slice %298 {offsets = [0, 0], sizes = [2, 32], strides = [1, 1]} : vector<2x128xf32> to vector<2x32xf32>
    %301 = vector.extract_strided_slice %298 {offsets = [0, 32], sizes = [2, 32], strides = [1, 1]} : vector<2x128xf32> to vector<2x32xf32>
    %302 = vector.extract_strided_slice %299 {offsets = [0, 64], sizes = [2, 32], strides = [1, 1]} : vector<2x128xf32> to vector<2x32xf32>
    %303 = vector.extract_strided_slice %298 {offsets = [0, 96], sizes = [2, 32], strides = [1, 1]} : vector<2x128xf32> to vector<2x32xf32>
    %304 = arith.mulf %301, %269 : vector<2x32xf32>
    %305 = arith.mulf %300, %302 : vector<2x32xf32>
    %306 = arith.addf %304, %305 : vector<2x32xf32>
    %307 = math.tanh %306 : vector<2x32xf32>
    %308 = arith.mulf %303, %307 : vector<2x32xf32>
    %c0_47 = arith.constant 0 : index
    %c0_48 = arith.constant 0 : index
    %309 = vector.load %arg7[%c0_47, %c0_48] : memref<1x32xf32, #tpu.memory_space<vmem>>, vector<1x32xf32>
    %310 = vector.broadcast %309 : vector<1x32xf32> to vector<2x32xf32>
    %311 = arith.mulf %308, %310 : vector<2x32xf32>
    %cst_49 = arith.constant dense<0.000000e+00> : vector<2xf32>
    %312 = vector.multi_reduction <add>, %311, %cst_49 [1] : vector<2x32xf32> to vector<2xf32>
    %313 = vector.shape_cast %312 : vector<2xf32> to vector<2x1xf32>
    %c0_50 = arith.constant 0 : index
    %c0_51 = arith.constant 0 : index
    %314 = vector.load %arg8[%c0_50, %c0_51] : memref<1x1xf32, #tpu.memory_space<vmem>>, vector<1x1xf32>
    %315 = vector.broadcast %314 : vector<1x1xf32> to vector<2x1xf32>
    %316 = arith.addf %313, %315 : vector<2x1xf32>
    %c0_52 = arith.constant 0 : index
    %c0_53 = arith.constant 0 : index
    %317 = vector.load %arg9[%c0_52, %c0_53] : memref<2x1xf32, #tpu.memory_space<vmem>>, vector<2x1xf32>
    tpu.vector_store %arg9[%c0_52, %c0_53], %316 {strides = array<i32>} : memref<2x1xf32, #tpu.memory_space<vmem>>, vector<2x1xf32>,
    return
  }
  func.func @transform_0(%arg0: i32) -> (i32, i32) {
    %c0_i32 = arith.constant 0 : i32
    %c0_i32_0 = arith.constant 0 : i32
    %c0_i32_1 = arith.constant 0 : i32
    return %c0_i32, %c0_i32_0 : i32, i32
  }
  func.func @transform_1(%arg0: i32) -> (i32, i32) {
    %c0_i32 = arith.constant 0 : i32
    %c0_i32_0 = arith.constant 0 : i32
    %c0_i32_1 = arith.constant 0 : i32
    return %c0_i32, %c0_i32_0 : i32, i32
  }
  func.func @transform_2(%arg0: i32) -> (i32, i32) {
    %c0_i32 = arith.constant 0 : i32
    %c0_i32_0 = arith.constant 0 : i32
    %c0_i32_1 = arith.constant 0 : i32
    return %c0_i32, %c0_i32_0 : i32, i32
  }
  func.func @transform_3(%arg0: i32) -> (i32, i32) {
    %c0_i32 = arith.constant 0 : i32
    %c0_i32_0 = arith.constant 0 : i32
    %c0_i32_1 = arith.constant 0 : i32
    return %c0_i32, %c0_i32_0 : i32, i32
  }
  func.func @transform_4(%arg0: i32) -> (i32, i32) {
    %c0_i32 = arith.constant 0 : i32
    %c0_i32_0 = arith.constant 0 : i32
    %c0_i32_1 = arith.constant 0 : i32
    return %c0_i32, %c0_i32_0 : i32, i32
  }
  func.func @transform_5(%arg0: i32) -> (i32, i32) {
    %c0_i32 = arith.constant 0 : i32
    %c0_i32_0 = arith.constant 0 : i32
    %c0_i32_1 = arith.constant 0 : i32
    return %c0_i32, %c0_i32_0 : i32, i32
  }
  func.func @transform_6(%arg0: i32) -> (i32, i32) {
    %c0_i32 = arith.constant 0 : i32
    %c0_i32_0 = arith.constant 0 : i32
    %c0_i32_1 = arith.constant 0 : i32
    return %c0_i32, %c0_i32_0 : i32, i32
  }
  func.func @transform_7(%arg0: i32) -> (i32, i32) {
    %c0_i32 = arith.constant 0 : i32
    %c0_i32_0 = arith.constant 0 : i32
    %c0_i32_1 = arith.constant 0 : i32
    return %c0_i32, %c0_i32_0 : i32, i32
  }
  func.func @transform_8(%arg0: i32) -> (i32, i32) {
    %c0_i32 = arith.constant 0 : i32
    %c0_i32_0 = arith.constant 0 : i32
    %c0_i32_1 = arith.constant 0 : i32
    return %c0_i32, %c0_i32_0 : i32, i32
  }
}

</mosaic_0001>

<llo_original>
// kernel: lstm_forward.1
$region0: #{lstm_forward.1}
  #allocation0 [shape = 'u32[]', space=smem, size = 0x4, offset = 0x4, fixed_abs, tag = 'smem constant byte address 0x4 - core index']
  #allocation1 [shape = 'u32[72,128]{1,0:T(1,128)}', space=vmem, size = 0x9000, scoped, tag = 'internal scratch']
  #allocation2 [shape = 'f32[1,1]{1,0:T(1,128)S(1)}', space=vmem, size = 0x200, scoped, tag = 'scoped memory for lstm_forward.1']
  %s0 = inlined_call_operand.vmem [shape: f32[16,4], index: 0, kind: input, shape index: {}]
  %s1 = inlined_call_operand.vmem [shape: f32[4,128], index: 1, kind: input, shape index: {}]
  %s2 = inlined_call_operand.hbm [shape: f32[32,128], index: 2, kind: input, shape index: {}]
  %s3 = inlined_call_operand.vmem [shape: f32[1,128], index: 3, kind: input, shape index: {}]
  %s4 = inlined_call_operand.hbm [shape: f32[64,128], index: 4, kind: input, shape index: {}]
  %s5 = inlined_call_operand.vmem [shape: f32[1,128], index: 5, kind: input, shape index: {}]
  %s6 = inlined_call_operand.vmem [shape: f32[1,32], index: 6, kind: input, shape index: {}]
  %s7 = inlined_call_operand.<no memory space> [shape: f32[1,1], index: 7, kind: input, shape index: {}]
  %s8 = inlined_call_operand.vmem [shape: f32[2,1], index: 8, kind: output, shape index: {}]
  %s9 = sld [smem:[#allocation0]]
  $region50: #{lstm_forward.1} parent=0
    _
  %s11 = ssub.s32 1, %s9
  %s12 = scalar_select 0, %s11, %s9
  %v13 = vstv %s7
  %14 = vst [vmem:[#allocation2] sm:$0x1] %v13
  $region1: #{lstm_forward.1} parent=0
    #allocation3 [shape = 'u8[16384]{0}', space=vmem, size = 0x4000, scoped, tag = 'input window, operand 2, single buffered']
    #allocation4 [shape = 's32[1]{0}', space=sflag, size = 0x4, scoped, tag = 'scoped memory for lstm_forward.1']
    #allocation5 [shape = 'u8[32768]{0}', space=vmem, size = 0x8000, scoped, tag = 'input window, operand 4, single buffered']
    #allocation6 [shape = 's32[1]{0}', space=sflag, size = 0x4, scoped, tag = 'scoped memory for lstm_forward.1']
    %15 = vsyncpa [#allocation4], 0
    %16 = vsyncpa [#allocation6], 0
    // Predicated region
    $region2: #{lstm_forward.1} parent=1 // pred_check
      _
    $region3: #{lstm_forward.1} parent=1 // pred_check_branch
      %18 = sbr.rel (0) target = $region5
    $region4: #{lstm_forward.1} parent=1 // pred_region
      _
    $region5: #{lstm_forward.1} parent=1 // pred_fallthru
      _
    // Predicated region
    $region6: #{lstm_forward.1} parent=1 // pred_check
      _
    $region7: #{lstm_forward.1} parent=1 // pred_check_branch
      %20 = sbr.rel (0) target = $region9
    $region8: #{lstm_forward.1} parent=1 // pred_region
      _
    $region9: #{lstm_forward.1} parent=1 // pred_fallthru
      _
    // Predicated region
    $region10: #{lstm_forward.1} parent=1 // pred_check
      _
    $region11: #{lstm_forward.1} parent=1 // pred_check_branch
      %22 = sbr.rel (0) target = $region13
    $region12: #{lstm_forward.1} parent=1 // pred_region
      %24 = vsyncadd [#allocation4], 0
      %s25 = sshll.u32 %s2, 4
      %s26 = int_to_ptr.hbm [resolvable:$true] %s25
      %s27 = sshll.u32 [#allocation3], 4
      %s28 = int_to_ptr.vmem [resolvable:$true] %s27
      %33 = dma.hbm_to_vmem [thread:$0]  %s26, 512, %s28, [#allocation4], 128, 128, 8
    $region13: #{lstm_forward.1} parent=1 // pred_fallthru
      _
    // Predicated region
    $region14: #{lstm_forward.1} parent=1 // pred_check
      _
    $region15: #{lstm_forward.1} parent=1 // pred_check_branch
      %35 = sbr.rel (0) target = $region17
    $region16: #{lstm_forward.1} parent=1 // pred_region
      _
    $region17: #{lstm_forward.1} parent=1 // pred_fallthru
      _
    // Predicated region
    $region18: #{lstm_forward.1} parent=1 // pred_check
      _
    $region19: #{lstm_forward.1} parent=1 // pred_check_branch
      %37 = sbr.rel (0) target = $region21
    $region20: #{lstm_forward.1} parent=1 // pred_region
      %39 = vsyncadd [#allocation6], 0
      %s40 = sshll.u32 %s4, 4
      %s41 = int_to_ptr.hbm [resolvable:$true] %s40
      %s42 = sshll.u32 [#allocation5], 4
      %s43 = int_to_ptr.vmem [resolvable:$true] %s42
      %48 = dma.hbm_to_vmem [thread:$0]  %s41, 1024, %s43, [#allocation6], 128, 128, 8
    $region21: #{lstm_forward.1} parent=1 // pred_fallthru
      _
    // Predicated region
    $region22: #{lstm_forward.1} parent=1 // pred_check
      _
    $region23: #{lstm_forward.1} parent=1 // pred_check_branch
      %50 = sbr.rel (0) target = $region25
    $region24: #{lstm_forward.1} parent=1 // pred_region
      _
    $region25: #{lstm_forward.1} parent=1 // pred_fallthru
      _
    // Predicated region
    $region26: #{lstm_forward.1} parent=1 // pred_check
      _
    $region27: #{lstm_forward.1} parent=1 // pred_check_branch
      %52 = sbr.rel (0) target = $region29
    $region28: #{lstm_forward.1} parent=1 // pred_region
      _
    $region29: #{lstm_forward.1} parent=1 // pred_fallthru
      _
    // Predicated region
    $region30: #{lstm_forward.1} parent=1 // pred_check
      _
    $region31: #{lstm_forward.1} parent=1 // pred_check_branch
      %54 = sbr.rel (0) target = $region33
    $region32: #{lstm_forward.1} parent=1 // pred_region
      _
    $region33: #{lstm_forward.1} parent=1 // pred_fallthru
      _
    // Predicated region
    $region34: #{lstm_forward.1} parent=1 // pred_check
      _
    $region35: #{lstm_forward.1} parent=1 // pred_check_branch
      %56 = sbr.rel (0) target = $region37
    $region36: #{lstm_forward.1} parent=1 // pred_region
      %58 = dma.done [#allocation4], 512
    $region37: #{lstm_forward.1} parent=1 // pred_fallthru
      _
    // Predicated region
    $region38: #{lstm_forward.1} parent=1 // pred_check
      _
    $region39: #{lstm_forward.1} parent=1 // pred_check_branch
      %60 = sbr.rel (0) target = $region41
    $region40: #{lstm_forward.1} parent=1 // pred_region
      %62 = dma.done [#allocation6], 1024
    $region41: #{lstm_forward.1} parent=1 // pred_fallthru
      _
    %v63 = vld [vmem:[%s0] sm:$0xff]
    %v64 = vld [vmem:[%s0 + $0x8] sm:$0xff]
    %v65 = vld [vmem:[%s1] sm:$0xf]
    %v66 = vld [vmem:[%s3] sm:$0x1]
    %v68 = vperm.slane %v66, 0
    %vm70 = vcmask 31744
    %v72 = vsel %vm70, %v63, 0
    %v75 = vsel %vm70, %v64, 0
    %vm77 = vcmask 1043456
    %v79 = vsel %vm77, %v65, 0
    %81 = vmatpush.msra.mxu0 0.0
    %82 = vmatpush.msra.mxu0 0.0
    %83 = vmatpush.msra.mxu0 0.0
    %84 = vmatpush.msra.mxu0 0.0
    %85 = vmatpush.msra.mxu0 0.0
    %86 = vmatpush.msra.mxu0 0.0
    %87 = vmatpush.msra.mxu0 0.0
    %88 = vmatpush.msra.mxu0 0.0
    %89 = vmatpush.msra.mxu0 0.0
    %90 = vmatpush.msra.mxu0 0.0
    %91 = vmatpush.msra.mxu0 0.0
    %92 = vmatpush.msra.mxu0 0.0
    %93 = vmatpush.msra.mxu0 0.0
    %94 = vmatpush.msra.mxu0 0.0
    %95 = vmatpush.msra.mxu0 0.0
    %96 = vmatpush.msra.mxu0 %v79
    %97 = vmatmul.f32.gmra.mxu0 %v72
    %v98 = vpop.f32.mrf.mxu0
    %v99 = vadd.f32 %v68, %v98
    %100 = vmatmul.f32.gmra.mxu0 %v75
    %v101 = vpop.f32.mrf.mxu0
    %v102 = vadd.f32 %v68, %v101
    %103 = vdwg.mxu0
    %v104 = vld [vmem:[#allocation3] sm:$0xff]
    %v105 = vld [vmem:[#allocation3 + $0x8] sm:$0xff]
    %v106 = vld [vmem:[#allocation3 + $0x10] sm:$0xff]
    %v107 = vld [vmem:[#allocation3 + $0x18] sm:$0xff]
    %v108 = vld [vmem:[#allocation5] sm:$0xff]
    %v109 = vld [vmem:[#allocation5 + $0x8] sm:$0xff]
    %v110 = vld [vmem:[#allocation5 + $0x10] sm:$0xff]
    %v111 = vld [vmem:[#allocation5 + $0x18] sm:$0xff]
    %v112 = vld [vmem:[#allocation5 + $0x20] sm:$0xff]
    %v113 = vld [vmem:[#allocation5 + $0x28] sm:$0xff]
    %v114 = vld [vmem:[#allocation5 + $0x30] sm:$0xff]
    %v115 = vld [vmem:[#allocation5 + $0x38] sm:$0xff]
    %v116 = vld [vmem:[%s5] sm:$0x1]
    %vm117 = vcmask 261120
    %v119 = vsel %vm117, 0.0, 0
    %121 = vmatpush.msra.mxu0 0.0
    %122 = vmatpush.msra.mxu0 0.0
    %123 = vmatpush.msra.mxu0 0.0
    %124 = vmatpush.msra.mxu0 0.0
    %125 = vmatpush.msra.mxu0 0.0
    %126 = vmatpush.msra.mxu0 0.0
    %127 = vmatpush.msra.mxu0 0.0
    %128 = vmatpush.msra.mxu0 0.0
    %129 = vmatpush.msra.mxu0 0.0
    %130 = vmatpush.msra.mxu0 0.0
    %131 = vmatpush.msra.mxu0 0.0
    %132 = vmatpush.msra.mxu0 0.0
    %133 = vmatpush.msra.mxu0 %v107
    %134 = vmatpush.msra.mxu0 %v106
    %135 = vmatpush.msra.mxu0 %v105
    %136 = vmatpush.msra.mxu0 %v104
    %137 = vmatmul.f32.gmra.mxu0 %v119
    %v138 = vpop.f32.mrf.mxu0
    %v139 = vadd.f32 0.0, %v138
    %140 = vdwg.mxu0
    %v141 = vadd.f32 %v99, %v139
    %v142 = vxor.u32 %v141, 2147483648
    %v143 = vmul.f32 %v142, 1.442695
    %v144 = vpow.pop %v143
    %v145 = vadd.f32 %v144, 1.0
    %v146 = vrcp.pop %v145
    %v147 = vmul.f32 %v145, %v146
    %v148 = vsub.f32 1.0, %v147
    %v149 = vmul.f32 %v146, %v148
    %v150 = vadd.f32 %v146, %v149
    %vm151 = vweird.f32 %v145
    %vm152 = vweird.f32 %v146
    %vm153 = vmor %vm151, %vm152
    %v154 = vsel %vm153, %v146, %v150
    %v155 = vand.u32 2147483647, %v145
    %vm156 = vcmp.eq.f32.partialorder %v155, 8.507059e+37
    %v157 = vand.u32 %v145, 2147483648
    %v158 = vor.u32 1.1754944e-38, %v157
    %v159 = vsel %vm156, %v158, %v154
    %v160 = vmul.f32 1.0, %v159
    %v161 = vtanh.pop %v141
    %v162 = vmul.f32 %v160, 0.0
    %164 = vrot.lane.b32.xlu0 %v161, 64
    %v165 = vpop.permute.xlu0 %164
    %v167 = vmul.f32 %v160, %v165
    %169 = vrot.lane.b32.xlu0 %v167, 32
    %v170 = vpop.permute.xlu0 %169
    %v172 = vadd.f32 %v162, %v170
    %v173 = vtanh.pop %v172
    %175 = vrot.lane.b32.xlu0 %v173, 64
    %v176 = vpop.permute.xlu0 %175
    %v178 = vmul.f32 %v160, %v176
    %180 = vrot.lane.b32.xlu0 %v178, 32
    %v181 = vpop.permute.xlu0 %180
    %v183 = vsel %vm117, %v181, 0.0
    %v185 = vperm.slane %v116, 0
    %vm187 = vcmask 523264
    %v189 = vsel %vm187, %v183, 0
    %191 = vmatpush.msra.mxu0 0.0
    %192 = vmatpush.msra.mxu0 0.0
    %193 = vmatpush.msra.mxu0 0.0
    %194 = vmatpush.msra.mxu0 0.0
    %195 = vmatpush.msra.mxu0 0.0
    %196 = vmatpush.msra.mxu0 0.0
    %197 = vmatpush.msra.mxu0 0.0
    %198 = vmatpush.msra.mxu0 0.0
    %199 = vmatpush.msra.mxu0 %v115
    %200 = vmatpush.msra.mxu0 %v114
    %201 = vmatpush.msra.mxu0 %v113
    %202 = vmatpush.msra.mxu0 %v112
    %203 = vmatpush.msra.mxu0 %v111
    %204 = vmatpush.msra.mxu0 %v110
    %205 = vmatpush.msra.mxu0 %v109
    %206 = vmatpush.msra.mxu0 %v108
    %207 = vmatmul.f32.gmra.mxu0 %v189
    %v208 = vpop.f32.mrf.mxu0
    %v209 = vadd.f32 %v185, %v208
    %210 = vdwg.mxu0
    %v211 = vxor.u32 %v209, 2147483648
    %v212 = vmul.f32 %v211, 1.442695
    %v213 = vpow.pop %v212
    %v214 = vadd.f32 %v213, 1.0
    %v215 = vrcp.pop %v214
    %v216 = vmul.f32 %v214, %v215
    %v217 = vsub.f32 1.0, %v216
    %v218 = vmul.f32 %v215, %v217
    %v219 = vadd.f32 %v215, %v218
    %vm220 = vweird.f32 %v214
    %vm221 = vweird.f32 %v215
    %vm222 = vmor %vm220, %vm221
    %v223 = vsel %vm222, %v215, %v219
    %v224 = vand.u32 2147483647, %v214
    %vm225 = vcmp.eq.f32.partialorder %v224, 8.507059e+37
    %v226 = vand.u32 %v214, 2147483648
    %v227 = vor.u32 1.1754944e-38, %v226
    %v228 = vsel %vm225, %v227, %v223
    %v229 = vmul.f32 1.0, %v228
    %v230 = vtanh.pop %v209
    %v231 = vmul.f32 %v229, 0.0
    %233 = vrot.lane.b32.xlu0 %v230, 64
    %v234 = vpop.permute.xlu0 %233
    %v236 = vmul.f32 %v229, %v234
    %238 = vrot.lane.b32.xlu0 %v236, 32
    %v239 = vpop.permute.xlu0 %238
    %v241 = vadd.f32 %v231, %v239
    %v242 = vtanh.pop %v241
    %244 = vrot.lane.b32.xlu0 %v242, 64
    %v245 = vpop.permute.xlu0 %244
    %v247 = vmul.f32 %v229, %v245
    %v248 = vsel %vm117, %v181, 0
    %250 = vmatpush.msra.mxu0 0.0
    %251 = vmatpush.msra.mxu0 0.0
    %252 = vmatpush.msra.mxu0 0.0
    %253 = vmatpush.msra.mxu0 0.0
    %254 = vmatpush.msra.mxu0 0.0
    %255 = vmatpush.msra.mxu0 0.0
    %256 = vmatpush.msra.mxu0 0.0
    %257 = vmatpush.msra.mxu0 0.0
    %258 = vmatpush.msra.mxu0 0.0
    %259 = vmatpush.msra.mxu0 0.0
    %260 = vmatpush.msra.mxu0 0.0
    %261 = vmatpush.msra.mxu0 0.0
    %262 = vmatpush.msra.mxu0 %v107
    %263 = vmatpush.msra.mxu0 %v106
    %264 = vmatpush.msra.mxu0 %v105
    %265 = vmatpush.msra.mxu0 %v104
    %266 = vmatmul.f32.gmra.mxu0 %v248
    %v267 = vpop.f32.mrf.mxu0
    %v268 = vadd.f32 0.0, %v267
    %269 = vdwg.mxu0
    %v271 = vrot.slane %v268, 6
    %v273 = vadd.f32 %v99, %v271
    %v274 = vxor.u32 %v273, 2147483648
    %v275 = vmul.f32 %v274, 1.442695
    %v276 = vpow.pop %v275
    %v277 = vadd.f32 %v276, 1.0
    %v278 = vrcp.pop %v277
    %v279 = vmul.f32 %v277, %v278
    %v280 = vsub.f32 1.0, %v279
    %v281 = vmul.f32 %v278, %v280
    %v282 = vadd.f32 %v278, %v281
    %vm283 = vweird.f32 %v277
    %vm284 = vweird.f32 %v278
    %vm285 = vmor %vm283, %vm284
    %v286 = vsel %vm285, %v278, %v282
    %v287 = vand.u32 2147483647, %v277
    %vm288 = vcmp.eq.f32.partialorder %v287, 8.507059e+37
    %v289 = vand.u32 %v277, 2147483648
    %v290 = vor.u32 1.1754944e-38, %v289
    %v291 = vsel %vm288, %v290, %v286
    %v292 = vmul.f32 1.0, %v291
    %v293 = vtanh.pop %v273
    %v295 = vrot.slane %v172, 6
    %v297 = vmul.f32 %v292, %v295
    %299 = vrot.lane.b32.xlu0 %v293, 64
    %v300 = vpop.permute.xlu0 %299
    %v302 = vmul.f32 %v292, %v300
    %304 = vrot.lane.b32.xlu0 %v302, 32
    %v305 = vpop.permute.xlu0 %304
    %v307 = vadd.f32 %v297, %v305
    %v308 = vtanh.pop %v307
    %310 = vrot.lane.b32.xlu0 %v308, 64
    %v311 = vpop.permute.xlu0 %310
    %v313 = vmul.f32 %v292, %v311
    %315 = vrot.lane.b32.xlu0 %v313, 32
    %v316 = vpop.permute.xlu0 %315
    %v319 = vrot.slane %v247, 6
    %320 = vrot.lane.b32.xlu0 %v319, 64
    %v321 = vpop.permute.xlu0 %320
    %v323 = vsel %vm117, %v316, %v321
    %v325 = vrot.slane %v323, 2
    %v326 = vsel %vm187, %v325, 0
    %328 = vmatpush.msra.mxu0 0.0
    %329 = vmatpush.msra.mxu0 0.0
    %330 = vmatpush.msra.mxu0 0.0
    %331 = vmatpush.msra.mxu0 0.0
    %332 = vmatpush.msra.mxu0 0.0
    %333 = vmatpush.msra.mxu0 0.0
    %334 = vmatpush.msra.mxu0 0.0
    %335 = vmatpush.msra.mxu0 0.0
    %336 = vmatpush.msra.mxu0 %v115
    %337 = vmatpush.msra.mxu0 %v114
    %338 = vmatpush.msra.mxu0 %v113
    %339 = vmatpush.msra.mxu0 %v112
    %340 = vmatpush.msra.mxu0 %v111
    %341 = vmatpush.msra.mxu0 %v110
    %342 = vmatpush.msra.mxu0 %v109
    %343 = vmatpush.msra.mxu0 %v108
    %344 = vmatmul.f32.gmra.mxu0 %v326
    %v345 = vpop.f32.mrf.mxu0
    %v346 = vadd.f32 %v185, %v345
    %347 = vdwg.mxu0
    %v348 = vxor.u32 %v346, 2147483648
    %v349 = vmul.f32 %v348, 1.442695
    %v350 = vpow.pop %v349
    %v351 = vadd.f32 %v350, 1.0
    %v352 = vrcp.pop %v351
    %v353 = vmul.f32 %v351, %v352
    %v354 = vsub.f32 1.0, %v353
    %v355 = vmul.f32 %v352, %v354
    %v356 = vadd.f32 %v352, %v355
    %vm357 = vweird.f32 %v351
    %vm358 = vweird.f32 %v352
    %vm359 = vmor %vm357, %vm358
    %v360 = vsel %vm359, %v352, %v356
    %v361 = vand.u32 2147483647, %v351
    %vm362 = vcmp.eq.f32.partialorder %v361, 8.507059e+37
    %v363 = vand.u32 %v351, 2147483648
    %v364 = vor.u32 1.1754944e-38, %v363
    %v365 = vsel %vm362, %v364, %v360
    %v366 = vmul.f32 1.0, %v365
    %v367 = vtanh.pop %v346
    %v368 = vmul.f32 %v366, %v241
    %370 = vrot.lane.b32.xlu0 %v367, 64
    %v371 = vpop.permute.xlu0 %370
    %v373 = vmul.f32 %v366, %v371
    %375 = vrot.lane.b32.xlu0 %v373, 32
    %v376 = vpop.permute.xlu0 %375
    %v378 = vadd.f32 %v368, %v376
    %v379 = vtanh.pop %v378
    %381 = vrot.lane.b32.xlu0 %v379, 64
    %v382 = vpop.permute.xlu0 %381
    %v384 = vmul.f32 %v366, %v382
    %v385 = vrot.slane %v313, 2
    %386 = vrot.lane.b32.xlu0 %v385, 32
    %v387 = vpop.permute.xlu0 %386
    %v388 = vsel %vm117, %v387, 0
    %390 = vmatpush.msra.mxu0 0.0
    %391 = vmatpush.msra.mxu0 0.0
    %392 = vmatpush.msra.mxu0 0.0
    %393 = vmatpush.msra.mxu0 0.0
    %394 = vmatpush.msra.mxu0 0.0
    %395 = vmatpush.msra.mxu0 0.0
    %396 = vmatpush.msra.mxu0 0.0
    %397 = vmatpush.msra.mxu0 0.0
    %398 = vmatpush.msra.mxu0 0.0
    %399 = vmatpush.msra.mxu0 0.0
    %400 = vmatpush.msra.mxu0 0.0
    %401 = vmatpush.msra.mxu0 0.0
    %402 = vmatpush.msra.mxu0 %v107
    %403 = vmatpush.msra.mxu0 %v106
    %404 = vmatpush.msra.mxu0 %v105
    %405 = vmatpush.msra.mxu0 %v104
    %406 = vmatmul.f32.gmra.mxu0 %v388
    %v407 = vpop.f32.mrf.mxu0
    %v408 = vadd.f32 0.0, %v407
    %409 = vdwg.mxu0
    %v411 = vrot.slane %v408, 4
    %v413 = vadd.f32 %v99, %v411
    %v414 = vxor.u32 %v413, 2147483648
    %v415 = vmul.f32 %v414, 1.442695
    %v416 = vpow.pop %v415
    %v417 = vadd.f32 %v416, 1.0
    %v418 = vrcp.pop %v417
    %v419 = vmul.f32 %v417, %v418
    %v420 = vsub.f32 1.0, %v419
    %v421 = vmul.f32 %v418, %v420
    %v422 = vadd.f32 %v418, %v421
    %vm423 = vweird.f32 %v417
    %vm424 = vweird.f32 %v418
    %vm425 = vmor %vm423, %vm424
    %v426 = vsel %vm425, %v418, %v422
    %v427 = vand.u32 2147483647, %v417
    %vm428 = vcmp.eq.f32.partialorder %v427, 8.507059e+37
    %v429 = vand.u32 %v417, 2147483648
    %v430 = vor.u32 1.1754944e-38, %v429
    %v431 = vsel %vm428, %v430, %v426
    %v432 = vmul.f32 1.0, %v431
    %v433 = vtanh.pop %v413
    %v435 = vrot.slane %v307, 6
    %v437 = vmul.f32 %v432, %v435
    %439 = vrot.lane.b32.xlu0 %v433, 64
    %v440 = vpop.permute.xlu0 %439
    %v442 = vmul.f32 %v432, %v440
    %444 = vrot.lane.b32.xlu0 %v442, 32
    %v445 = vpop.permute.xlu0 %444
    %v447 = vadd.f32 %v437, %v445
    %v448 = vtanh.pop %v447
    %450 = vrot.lane.b32.xlu0 %v448, 64
    %v451 = vpop.permute.xlu0 %450
    %v453 = vmul.f32 %v432, %v451
    %455 = vrot.lane.b32.xlu0 %v453, 32
    %v456 = vpop.permute.xlu0 %455
    %v459 = vrot.slane %v384, 4
    %460 = vrot.lane.b32.xlu0 %v459, 64
    %v461 = vpop.permute.xlu0 %460
    %v463 = vsel %vm117, %v456, %v461
    %v465 = vrot.slane %v463, 4
    %v466 = vsel %vm187, %v465, 0
    %468 = vmatpush.msra.mxu0 0.0
    %469 = vmatpush.msra.mxu0 0.0
    %470 = vmatpush.msra.mxu0 0.0
    %471 = vmatpush.msra.mxu0 0.0
    %472 = vmatpush.msra.mxu0 0.0
    %473 = vmatpush.msra.mxu0 0.0
    %474 = vmatpush.msra.mxu0 0.0
    %475 = vmatpush.msra.mxu0 0.0
    %476 = vmatpush.msra.mxu0 %v115
    %477 = vmatpush.msra.mxu0 %v114
    %478 = vmatpush.msra.mxu0 %v113
    %479 = vmatpush.msra.mxu0 %v112
    %480 = vmatpush.msra.mxu0 %v111
    %481 = vmatpush.msra.mxu0 %v110
    %482 = vmatpush.msra.mxu0 %v109
    %483 = vmatpush.msra.mxu0 %v108
    %484 = vmatmul.f32.gmra.mxu0 %v466
    %v485 = vpop.f32.mrf.mxu0
    %v486 = vadd.f32 %v185, %v485
    %487 = vdwg.mxu0
    %v488 = vxor.u32 %v486, 2147483648
    %v489 = vmul.f32 %v488, 1.442695
    %v490 = vpow.pop %v489
    %v491 = vadd.f32 %v490, 1.0
    %v492 = vrcp.pop %v491
    %v493 = vmul.f32 %v491, %v492
    %v494 = vsub.f32 1.0, %v493
    %v495 = vmul.f32 %v492, %v494
    %v496 = vadd.f32 %v492, %v495
    %vm497 = vweird.f32 %v491
    %vm498 = vweird.f32 %v492
    %vm499 = vmor %vm497, %vm498
    %v500 = vsel %vm499, %v492, %v496
    %v501 = vand.u32 2147483647, %v491
    %vm502 = vcmp.eq.f32.partialorder %v501, 8.507059e+37
    %v503 = vand.u32 %v491, 2147483648
    %v504 = vor.u32 1.1754944e-38, %v503
    %v505 = vsel %vm502, %v504, %v500
    %v506 = vmul.f32 1.0, %v505
    %v507 = vtanh.pop %v486
    %v508 = vmul.f32 %v506, %v378
    %510 = vrot.lane.b32.xlu0 %v507, 64
    %v511 = vpop.permute.xlu0 %510
    %v513 = vmul.f32 %v506, %v511
    %515 = vrot.lane.b32.xlu0 %v513, 32
    %v516 = vpop.permute.xlu0 %515
    %v518 = vadd.f32 %v508, %v516
    %v519 = vtanh.pop %v518
    %521 = vrot.lane.b32.xlu0 %v519, 64
    %v522 = vpop.permute.xlu0 %521
    %v524 = vmul.f32 %v506, %v522
    %v525 = vrot.slane %v453, 4
    %526 = vrot.lane.b32.xlu0 %v525, 32
    %v527 = vpop.permute.xlu0 %526
    %v528 = vsel %vm117, %v527, 0
    %530 = vmatpush.msra.mxu0 0.0
    %531 = vmatpush.msra.mxu0 0.0
    %532 = vmatpush.msra.mxu0 0.0
    %533 = vmatpush.msra.mxu0 0.0
    %534 = vmatpush.msra.mxu0 0.0
    %535 = vmatpush.msra.mxu0 0.0
    %536 = vmatpush.msra.mxu0 0.0
    %537 = vmatpush.msra.mxu0 0.0
    %538 = vmatpush.msra.mxu0 0.0
    %539 = vmatpush.msra.mxu0 0.0
    %540 = vmatpush.msra.mxu0 0.0
    %541 = vmatpush.msra.mxu0 0.0
    %542 = vmatpush.msra.mxu0 %v107
    %543 = vmatpush.msra.mxu0 %v106
    %544 = vmatpush.msra.mxu0 %v105
    %545 = vmatpush.msra.mxu0 %v104
    %546 = vmatmul.f32.gmra.mxu0 %v528
    %v547 = vpop.f32.mrf.mxu0
    %v548 = vadd.f32 0.0, %v547
    %549 = vdwg.mxu0
    %v551 = vrot.slane %v548, 2
    %v553 = vadd.f32 %v99, %v551
    %v554 = vxor.u32 %v553, 2147483648
    %v555 = vmul.f32 %v554, 1.442695
    %v556 = vpow.pop %v555
    %v557 = vadd.f32 %v556, 1.0
    %v558 = vrcp.pop %v557
    %v559 = vmul.f32 %v557, %v558
    %v560 = vsub.f32 1.0, %v559
    %v561 = vmul.f32 %v558, %v560
    %v562 = vadd.f32 %v558, %v561
    %vm563 = vweird.f32 %v557
    %vm564 = vweird.f32 %v558
    %vm565 = vmor %vm563, %vm564
    %v566 = vsel %vm565, %v558, %v562
    %v567 = vand.u32 2147483647, %v557
    %vm568 = vcmp.eq.f32.partialorder %v567, 8.507059e+37
    %v569 = vand.u32 %v557, 2147483648
    %v570 = vor.u32 1.1754944e-38, %v569
    %v571 = vsel %vm568, %v570, %v566
    %v572 = vmul.f32 1.0, %v571
    %v573 = vtanh.pop %v553
    %v575 = vrot.slane %v447, 6
    %v577 = vmul.f32 %v572, %v575
    %579 = vrot.lane.b32.xlu0 %v573, 64
    %v580 = vpop.permute.xlu0 %579
    %v582 = vmul.f32 %v572, %v580
    %584 = vrot.lane.b32.xlu0 %v582, 32
    %v585 = vpop.permute.xlu0 %584
    %v587 = vadd.f32 %v577, %v585
    %v588 = vtanh.pop %v587
    %590 = vrot.lane.b32.xlu0 %v588, 64
    %v591 = vpop.permute.xlu0 %590
    %v593 = vmul.f32 %v572, %v591
    %595 = vrot.lane.b32.xlu0 %v593, 32
    %v596 = vpop.permute.xlu0 %595
    %v599 = vrot.slane %v524, 2
    %600 = vrot.lane.b32.xlu0 %v599, 64
    %v601 = vpop.permute.xlu0 %600
    %v603 = vsel %vm117, %v596, %v601
    %v605 = vrot.slane %v603, 6
    %v606 = vsel %vm187, %v605, 0
    %608 = vmatpush.msra.mxu0 0.0
    %609 = vmatpush.msra.mxu0 0.0
    %610 = vmatpush.msra.mxu0 0.0
    %611 = vmatpush.msra.mxu0 0.0
    %612 = vmatpush.msra.mxu0 0.0
    %613 = vmatpush.msra.mxu0 0.0
    %614 = vmatpush.msra.mxu0 0.0
    %615 = vmatpush.msra.mxu0 0.0
    %616 = vmatpush.msra.mxu0 %v115
    %617 = vmatpush.msra.mxu0 %v114
    %618 = vmatpush.msra.mxu0 %v113
    %619 = vmatpush.msra.mxu0 %v112
    %620 = vmatpush.msra.mxu0 %v111
    %621 = vmatpush.msra.mxu0 %v110
    %622 = vmatpush.msra.mxu0 %v109
    %623 = vmatpush.msra.mxu0 %v108
    %624 = vmatmul.f32.gmra.mxu0 %v606
    %v625 = vpop.f32.mrf.mxu0
    %v626 = vadd.f32 %v185, %v625
    %627 = vdwg.mxu0
    %v628 = vxor.u32 %v626, 2147483648
    %v629 = vmul.f32 %v628, 1.442695
    %v630 = vpow.pop %v629
    %v631 = vadd.f32 %v630, 1.0
    %v632 = vrcp.pop %v631
    %v633 = vmul.f32 %v631, %v632
    %v634 = vsub.f32 1.0, %v633
    %v635 = vmul.f32 %v632, %v634
    %v636 = vadd.f32 %v632, %v635
    %vm637 = vweird.f32 %v631
    %vm638 = vweird.f32 %v632
    %vm639 = vmor %vm637, %vm638
    %v640 = vsel %vm639, %v632, %v636
    %v641 = vand.u32 2147483647, %v631
    %vm642 = vcmp.eq.f32.partialorder %v641, 8.507059e+37
    %v643 = vand.u32 %v631, 2147483648
    %v644 = vor.u32 1.1754944e-38, %v643
    %v645 = vsel %vm642, %v644, %v640
    %v646 = vmul.f32 1.0, %v645
    %v647 = vtanh.pop %v626
    %v648 = vmul.f32 %v646, %v518
    %650 = vrot.lane.b32.xlu0 %v647, 64
    %v651 = vpop.permute.xlu0 %650
    %v653 = vmul.f32 %v646, %v651
    %655 = vrot.lane.b32.xlu0 %v653, 32
    %v656 = vpop.permute.xlu0 %655
    %v658 = vadd.f32 %v648, %v656
    %v659 = vtanh.pop %v658
    %661 = vrot.lane.b32.xlu0 %v659, 64
    %v662 = vpop.permute.xlu0 %661
    %v664 = vmul.f32 %v646, %v662
    %v665 = vrot.slane %v593, 6
    %666 = vrot.lane.b32.xlu0 %v665, 32
    %v667 = vpop.permute.xlu0 %666
    %v668 = vsel %vm117, %v667, 0
    %670 = vmatpush.msra.mxu0 0.0
    %671 = vmatpush.msra.mxu0 0.0
    %672 = vmatpush.msra.mxu0 0.0
    %673 = vmatpush.msra.mxu0 0.0
    %674 = vmatpush.msra.mxu0 0.0
    %675 = vmatpush.msra.mxu0 0.0
    %676 = vmatpush.msra.mxu0 0.0
    %677 = vmatpush.msra.mxu0 0.0
    %678 = vmatpush.msra.mxu0 0.0
    %679 = vmatpush.msra.mxu0 0.0
    %680 = vmatpush.msra.mxu0 0.0
    %681 = vmatpush.msra.mxu0 0.0
    %682 = vmatpush.msra.mxu0 %v107
    %683 = vmatpush.msra.mxu0 %v106
    %684 = vmatpush.msra.mxu0 %v105
    %685 = vmatpush.msra.mxu0 %v104
    %686 = vmatmul.f32.gmra.mxu0 %v668
    %v687 = vpop.f32.mrf.mxu0
    %v688 = vadd.f32 0.0, %v687
    %689 = vdwg.mxu0
    %v690 = vadd.f32 %v102, %v688
    %v691 = vxor.u32 %v690, 2147483648
    %v692 = vmul.f32 %v691, 1.442695
    %v693 = vpow.pop %v692
    %v694 = vadd.f32 %v693, 1.0
    %v695 = vrcp.pop %v694
    %v696 = vmul.f32 %v694, %v695
    %v697 = vsub.f32 1.0, %v696
    %v698 = vmul.f32 %v695, %v697
    %v699 = vadd.f32 %v695, %v698
    %vm700 = vweird.f32 %v694
    %vm701 = vweird.f32 %v695
    %vm702 = vmor %vm700, %vm701
    %v703 = vsel %vm702, %v695, %v699
    %v704 = vand.u32 2147483647, %v694
    %vm705 = vcmp.eq.f32.partialorder %v704, 8.507059e+37
    %v706 = vand.u32 %v694, 2147483648
    %v707 = vor.u32 1.1754944e-38, %v706
    %v708 = vsel %vm705, %v707, %v703
    %v709 = vmul.f32 1.0, %v708
    %v710 = vtanh.pop %v690
    %v712 = vrot.slane %v587, 6
    %v714 = vmul.f32 %v709, %v712
    %716 = vrot.lane.b32.xlu0 %v710, 64
    %v717 = vpop.permute.xlu0 %716
    %v719 = vmul.f32 %v709, %v717
    %721 = vrot.lane.b32.xlu0 %v719, 32
    %v722 = vpop.permute.xlu0 %721
    %v724 = vadd.f32 %v714, %v722
    %v725 = vtanh.pop %v724
    %727 = vrot.lane.b32.xlu0 %v725, 64
    %v728 = vpop.permute.xlu0 %727
    %v730 = vmul.f32 %v709, %v728
    %732 = vrot.lane.b32.xlu0 %v730, 32
    %v733 = vpop.permute.xlu0 %732
    %736 = vrot.lane.b32.xlu0 %v664, 64
    %v737 = vpop.permute.xlu0 %736
    %v739 = vsel %vm117, %v733, %v737
    %v741 = vsel %vm187, %v739, 0
    %743 = vmatpush.msra.mxu0 0.0
    %744 = vmatpush.msra.mxu0 0.0
    %745 = vmatpush.msra.mxu0 0.0
    %746 = vmatpush.msra.mxu0 0.0
    %747 = vmatpush.msra.mxu0 0.0
    %748 = vmatpush.msra.mxu0 0.0
    %749 = vmatpush.msra.mxu0 0.0
    %750 = vmatpush.msra.mxu0 0.0
    %751 = vmatpush.msra.mxu0 %v115
    %752 = vmatpush.msra.mxu0 %v114
    %753 = vmatpush.msra.mxu0 %v113
    %754 = vmatpush.msra.mxu0 %v112
    %755 = vmatpush.msra.mxu0 %v111
    %756 = vmatpush.msra.mxu0 %v110
    %757 = vmatpush.msra.mxu0 %v109
    %758 = vmatpush.msra.mxu0 %v108
    %759 = vmatmul.f32.gmra.mxu0 %v741
    %v760 = vpop.f32.mrf.mxu0
    %v761 = vadd.f32 %v185, %v760
    %762 = vdwg.mxu0
    %v763 = vxor.u32 %v761, 2147483648
    %v764 = vmul.f32 %v763, 1.442695
    %v765 = vpow.pop %v764
    %v766 = vadd.f32 %v765, 1.0
    %v767 = vrcp.pop %v766
    %v768 = vmul.f32 %v766, %v767
    %v769 = vsub.f32 1.0, %v768
    %v770 = vmul.f32 %v767, %v769
    %v771 = vadd.f32 %v767, %v770
    %vm772 = vweird.f32 %v766
    %vm773 = vweird.f32 %v767
    %vm774 = vmor %vm772, %vm773
    %v775 = vsel %vm774, %v767, %v771
    %v776 = vand.u32 2147483647, %v766
    %vm777 = vcmp.eq.f32.partialorder %v776, 8.507059e+37
    %v778 = vand.u32 %v766, 2147483648
    %v779 = vor.u32 1.1754944e-38, %v778
    %v780 = vsel %vm777, %v779, %v775
    %v781 = vmul.f32 1.0, %v780
    %v782 = vtanh.pop %v761
    %v783 = vmul.f32 %v781, %v658
    %785 = vrot.lane.b32.xlu0 %v782, 64
    %v786 = vpop.permute.xlu0 %785
    %v788 = vmul.f32 %v781, %v786
    %790 = vrot.lane.b32.xlu0 %v788, 32
    %v791 = vpop.permute.xlu0 %790
    %v793 = vadd.f32 %v783, %v791
    %v794 = vtanh.pop %v793
    %796 = vrot.lane.b32.xlu0 %v794, 64
    %v797 = vpop.permute.xlu0 %796
    %v799 = vmul.f32 %v781, %v797
    %v800 = vsel %vm117, %v733, 0
    %802 = vmatpush.msra.mxu0 0.0
    %803 = vmatpush.msra.mxu0 0.0
    %804 = vmatpush.msra.mxu0 0.0
    %805 = vmatpush.msra.mxu0 0.0
    %806 = vmatpush.msra.mxu0 0.0
    %807 = vmatpush.msra.mxu0 0.0
    %808 = vmatpush.msra.mxu0 0.0
    %809 = vmatpush.msra.mxu0 0.0
    %810 = vmatpush.msra.mxu0 0.0
    %811 = vmatpush.msra.mxu0 0.0
    %812 = vmatpush.msra.mxu0 0.0
    %813 = vmatpush.msra.mxu0 0.0
    %814 = vmatpush.msra.mxu0 %v107
    %815 = vmatpush.msra.mxu0 %v106
    %816 = vmatpush.msra.mxu0 %v105
    %817 = vmatpush.msra.mxu0 %v104
    %818 = vmatmul.f32.gmra.mxu0 %v800
    %v819 = vpop.f32.mrf.mxu0
    %v820 = vadd.f32 0.0, %v819
    %821 = vdwg.mxu0
    %v823 = vrot.slane %v820, 6
    %v825 = vadd.f32 %v102, %v823
    %v826 = vxor.u32 %v825, 2147483648
    %v827 = vmul.f32 %v826, 1.442695
    %v828 = vpow.pop %v827
    %v829 = vadd.f32 %v828, 1.0
    %v830 = vrcp.pop %v829
    %v831 = vmul.f32 %v829, %v830
    %v832 = vsub.f32 1.0, %v831
    %v833 = vmul.f32 %v830, %v832
    %v834 = vadd.f32 %v830, %v833
    %vm835 = vweird.f32 %v829
    %vm836 = vweird.f32 %v830
    %vm837 = vmor %vm835, %vm836
    %v838 = vsel %vm837, %v830, %v834
    %v839 = vand.u32 2147483647, %v829
    %vm840 = vcmp.eq.f32.partialorder %v839, 8.507059e+37
    %v841 = vand.u32 %v829, 2147483648
    %v842 = vor.u32 1.1754944e-38, %v841
    %v843 = vsel %vm840, %v842, %v838
    %v844 = vmul.f32 1.0, %v843
    %v845 = vtanh.pop %v825
    %v847 = vrot.slane %v724, 6
    %v849 = vmul.f32 %v844, %v847
    %851 = vrot.lane.b32.xlu0 %v845, 64
    %v852 = vpop.permute.xlu0 %851
    %v854 = vmul.f32 %v844, %v852
    %856 = vrot.lane.b32.xlu0 %v854, 32
    %v857 = vpop.permute.xlu0 %856
    %v859 = vadd.f32 %v849, %v857
    %v860 = vtanh.pop %v859
    %862 = vrot.lane.b32.xlu0 %v860, 64
    %v863 = vpop.permute.xlu0 %862
    %v865 = vmul.f32 %v844, %v863
    %867 = vrot.lane.b32.xlu0 %v865, 32
    %v868 = vpop.permute.xlu0 %867
    %v871 = vrot.slane %v799, 6
    %872 = vrot.lane.b32.xlu0 %v871, 64
    %v873 = vpop.permute.xlu0 %872
    %v875 = vsel %vm117, %v868, %v873
    %v877 = vrot.slane %v875, 2
    %v878 = vsel %vm187, %v877, 0
    %880 = vmatpush.msra.mxu0 0.0
    %881 = vmatpush.msra.mxu0 0.0
    %882 = vmatpush.msra.mxu0 0.0
    %883 = vmatpush.msra.mxu0 0.0
    %884 = vmatpush.msra.mxu0 0.0
    %885 = vmatpush.msra.mxu0 0.0
    %886 = vmatpush.msra.mxu0 0.0
    %887 = vmatpush.msra.mxu0 0.0
    %888 = vmatpush.msra.mxu0 %v115
    %889 = vmatpush.msra.mxu0 %v114
    %890 = vmatpush.msra.mxu0 %v113
    %891 = vmatpush.msra.mxu0 %v112
    %892 = vmatpush.msra.mxu0 %v111
    %893 = vmatpush.msra.mxu0 %v110
    %894 = vmatpush.msra.mxu0 %v109
    %895 = vmatpush.msra.mxu0 %v108
    %896 = vmatmul.f32.gmra.mxu0 %v878
    %v897 = vpop.f32.mrf.mxu0
    %v898 = vadd.f32 %v185, %v897
    %899 = vdwg.mxu0
    %v900 = vxor.u32 %v898, 2147483648
    %v901 = vmul.f32 %v900, 1.442695
    %v902 = vpow.pop %v901
    %v903 = vadd.f32 %v902, 1.0
    %v904 = vrcp.pop %v903
    %v905 = vmul.f32 %v903, %v904
    %v906 = vsub.f32 1.0, %v905
    %v907 = vmul.f32 %v904, %v906
    %v908 = vadd.f32 %v904, %v907
    %vm909 = vweird.f32 %v903
    %vm910 = vweird.f32 %v904
    %vm911 = vmor %vm909, %vm910
    %v912 = vsel %vm911, %v904, %v908
    %v913 = vand.u32 2147483647, %v903
    %vm914 = vcmp.eq.f32.partialorder %v913, 8.507059e+37
    %v915 = vand.u32 %v903, 2147483648
    %v916 = vor.u32 1.1754944e-38, %v915
    %v917 = vsel %vm914, %v916, %v912
    %v918 = vmul.f32 1.0, %v917
    %v919 = vtanh.pop %v898
    %v920 = vmul.f32 %v918, %v793
    %922 = vrot.lane.b32.xlu0 %v919, 64
    %v923 = vpop.permute.xlu0 %922
    %v925 = vmul.f32 %v918, %v923
    %927 = vrot.lane.b32.xlu0 %v925, 32
    %v928 = vpop.permute.xlu0 %927
    %v930 = vadd.f32 %v920, %v928
    %v931 = vtanh.pop %v930
    %933 = vrot.lane.b32.xlu0 %v931, 64
    %v934 = vpop.permute.xlu0 %933
    %v936 = vmul.f32 %v918, %v934
    %v937 = vrot.slane %v865, 2
    %938 = vrot.lane.b32.xlu0 %v937, 32
    %v939 = vpop.permute.xlu0 %938
    %v940 = vsel %vm117, %v939, 0
    %942 = vmatpush.msra.mxu0 0.0
    %943 = vmatpush.msra.mxu0 0.0
    %944 = vmatpush.msra.mxu0 0.0
    %945 = vmatpush.msra.mxu0 0.0
    %946 = vmatpush.msra.mxu0 0.0
    %947 = vmatpush.msra.mxu0 0.0
    %948 = vmatpush.msra.mxu0 0.0
    %949 = vmatpush.msra.mxu0 0.0
    %950 = vmatpush.msra.mxu0 0.0
    %951 = vmatpush.msra.mxu0 0.0
    %952 = vmatpush.msra.mxu0 0.0
    %953 = vmatpush.msra.mxu0 0.0
    %954 = vmatpush.msra.mxu0 %v107
    %955 = vmatpush.msra.mxu0 %v106
    %956 = vmatpush.msra.mxu0 %v105
    %957 = vmatpush.msra.mxu0 %v104
    %958 = vmatmul.f32.gmra.mxu0 %v940
    %v959 = vpop.f32.mrf.mxu0
    %v960 = vadd.f32 0.0, %v959
    %961 = vdwg.mxu0
    %v963 = vrot.slane %v960, 4
    %v965 = vadd.f32 %v102, %v963
    %v966 = vxor.u32 %v965, 2147483648
    %v967 = vmul.f32 %v966, 1.442695
    %v968 = vpow.pop %v967
    %v969 = vadd.f32 %v968, 1.0
    %v970 = vrcp.pop %v969
    %v971 = vmul.f32 %v969, %v970
    %v972 = vsub.f32 1.0, %v971
    %v973 = vmul.f32 %v970, %v972
    %v974 = vadd.f32 %v970, %v973
    %vm975 = vweird.f32 %v969
    %vm976 = vweird.f32 %v970
    %vm977 = vmor %vm975, %vm976
    %v978 = vsel %vm977, %v970, %v974
    %v979 = vand.u32 2147483647, %v969
    %vm980 = vcmp.eq.f32.partialorder %v979, 8.507059e+37
    %v981 = vand.u32 %v969, 2147483648
    %v982 = vor.u32 1.1754944e-38, %v981
    %v983 = vsel %vm980, %v982, %v978
    %v984 = vmul.f32 1.0, %v983
    %v985 = vtanh.pop %v965
    %v987 = vrot.slane %v859, 6
    %v989 = vmul.f32 %v984, %v987
    %991 = vrot.lane.b32.xlu0 %v985, 64
    %v992 = vpop.permute.xlu0 %991
    %v994 = vmul.f32 %v984, %v992
    %996 = vrot.lane.b32.xlu0 %v994, 32
    %v997 = vpop.permute.xlu0 %996
    %v999 = vadd.f32 %v989, %v997
    %v1000 = vtanh.pop %v999
    %1002 = vrot.lane.b32.xlu0 %v1000, 64
    %v1003 = vpop.permute.xlu0 %1002
    %v1005 = vmul.f32 %v984, %v1003
    %1007 = vrot.lane.b32.xlu0 %v1005, 32
    %v1008 = vpop.permute.xlu0 %1007
    %v1011 = vrot.slane %v936, 4
    %1012 = vrot.lane.b32.xlu0 %v1011, 64
    %v1013 = vpop.permute.xlu0 %1012
    %v1015 = vsel %vm117, %v1008, %v1013
    %v1017 = vrot.slane %v1015, 4
    %v1018 = vsel %vm187, %v1017, 0
    %1020 = vmatpush.msra.mxu0 0.0
    %1021 = vmatpush.msra.mxu0 0.0
    %1022 = vmatpush.msra.mxu0 0.0
    %1023 = vmatpush.msra.mxu0 0.0
    %1024 = vmatpush.msra.mxu0 0.0
    %1025 = vmatpush.msra.mxu0 0.0
    %1026 = vmatpush.msra.mxu0 0.0
    %1027 = vmatpush.msra.mxu0 0.0
    %1028 = vmatpush.msra.mxu0 %v115
    %1029 = vmatpush.msra.mxu0 %v114
    %1030 = vmatpush.msra.mxu0 %v113
    %1031 = vmatpush.msra.mxu0 %v112
    %1032 = vmatpush.msra.mxu0 %v111
    %1033 = vmatpush.msra.mxu0 %v110
    %1034 = vmatpush.msra.mxu0 %v109
    %1035 = vmatpush.msra.mxu0 %v108
    %1036 = vmatmul.f32.gmra.mxu0 %v1018
    %v1037 = vpop.f32.mrf.mxu0
    %v1038 = vadd.f32 %v185, %v1037
    %1039 = vdwg.mxu0
    %v1040 = vxor.u32 %v1038, 2147483648
    %v1041 = vmul.f32 %v1040, 1.442695
    %v1042 = vpow.pop %v1041
    %v1043 = vadd.f32 %v1042, 1.0
    %v1044 = vrcp.pop %v1043
    %v1045 = vmul.f32 %v1043, %v1044
    %v1046 = vsub.f32 1.0, %v1045
    %v1047 = vmul.f32 %v1044, %v1046
    %v1048 = vadd.f32 %v1044, %v1047
    %vm1049 = vweird.f32 %v1043
    %vm1050 = vweird.f32 %v1044
    %vm1051 = vmor %vm1049, %vm1050
    %v1052 = vsel %vm1051, %v1044, %v1048
    %v1053 = vand.u32 2147483647, %v1043
    %vm1054 = vcmp.eq.f32.partialorder %v1053, 8.507059e+37
    %v1055 = vand.u32 %v1043, 2147483648
    %v1056 = vor.u32 1.1754944e-38, %v1055
    %v1057 = vsel %vm1054, %v1056, %v1052
    %v1058 = vmul.f32 1.0, %v1057
    %v1059 = vtanh.pop %v1038
    %v1060 = vmul.f32 %v1058, %v930
    %1062 = vrot.lane.b32.xlu0 %v1059, 64
    %v1063 = vpop.permute.xlu0 %1062
    %v1065 = vmul.f32 %v1058, %v1063
    %1067 = vrot.lane.b32.xlu0 %v1065, 32
    %v1068 = vpop.permute.xlu0 %1067
    %v1070 = vadd.f32 %v1060, %v1068
    %v1071 = vtanh.pop %v1070
    %1073 = vrot.lane.b32.xlu0 %v1071, 64
    %v1074 = vpop.permute.xlu0 %1073
    %v1076 = vmul.f32 %v1058, %v1074
    %v1077 = vrot.slane %v1005, 4
    %1078 = vrot.lane.b32.xlu0 %v1077, 32
    %v1079 = vpop.permute.xlu0 %1078
    %v1080 = vsel %vm117, %v1079, 0
    %1082 = vmatpush.msra.mxu0 0.0
    %1083 = vmatpush.msra.mxu0 0.0
    %1084 = vmatpush.msra.mxu0 0.0
    %1085 = vmatpush.msra.mxu0 0.0
    %1086 = vmatpush.msra.mxu0 0.0
    %1087 = vmatpush.msra.mxu0 0.0
    %1088 = vmatpush.msra.mxu0 0.0
    %1089 = vmatpush.msra.mxu0 0.0
    %1090 = vmatpush.msra.mxu0 0.0
    %1091 = vmatpush.msra.mxu0 0.0
    %1092 = vmatpush.msra.mxu0 0.0
    %1093 = vmatpush.msra.mxu0 0.0
    %1094 = vmatpush.msra.mxu0 %v107
    %1095 = vmatpush.msra.mxu0 %v106
    %1096 = vmatpush.msra.mxu0 %v105
    %1097 = vmatpush.msra.mxu0 %v104
    %1098 = vmatmul.f32.gmra.mxu0 %v1080
    %v1099 = vpop.f32.mrf.mxu0
    %v1100 = vadd.f32 0.0, %v1099
    %1101 = vdwg.mxu0
    %v1103 = vrot.slane %v1100, 2
    %v1105 = vadd.f32 %v102, %v1103
    %v1106 = vxor.u32 %v1105, 2147483648
    %v1107 = vmul.f32 %v1106, 1.442695
    %v1108 = vpow.pop %v1107
    %v1109 = vadd.f32 %v1108, 1.0
    %v1110 = vrcp.pop %v1109
    %v1111 = vmul.f32 %v1109, %v1110
    %v1112 = vsub.f32 1.0, %v1111
    %v1113 = vmul.f32 %v1110, %v1112
    %v1114 = vadd.f32 %v1110, %v1113
    %vm1115 = vweird.f32 %v1109
    %vm1116 = vweird.f32 %v1110
    %vm1117 = vmor %vm1115, %vm1116
    %v1118 = vsel %vm1117, %v1110, %v1114
    %v1119 = vand.u32 2147483647, %v1109
    %vm1120 = vcmp.eq.f32.partialorder %v1119, 8.507059e+37
    %v1121 = vand.u32 %v1109, 2147483648
    %v1122 = vor.u32 1.1754944e-38, %v1121
    %v1123 = vsel %vm1120, %v1122, %v1118
    %v1124 = vmul.f32 1.0, %v1123
    %v1125 = vtanh.pop %v1105
    %v1127 = vrot.slane %v999, 6
    %v1129 = vmul.f32 %v1124, %v1127
    %1131 = vrot.lane.b32.xlu0 %v1125, 64
    %v1132 = vpop.permute.xlu0 %1131
    %v1134 = vmul.f32 %v1124, %v1132
    %1136 = vrot.lane.b32.xlu0 %v1134, 32
    %v1137 = vpop.permute.xlu0 %1136
    %v1139 = vadd.f32 %v1129, %v1137
    %v1140 = vtanh.pop %v1139
    %1142 = vrot.lane.b32.xlu0 %v1140, 64
    %v1143 = vpop.permute.xlu0 %1142
    %v1145 = vmul.f32 %v1124, %v1143
    %1147 = vrot.lane.b32.xlu0 %v1145, 32
    %v1148 = vpop.permute.xlu0 %1147
    %v1151 = vrot.slane %v1076, 2
    %1152 = vrot.lane.b32.xlu0 %v1151, 64
    %v1153 = vpop.permute.xlu0 %1152
    %v1155 = vsel %vm117, %v1148, %v1153
    %v1157 = vrot.slane %v1155, 6
    %v1158 = vsel %vm187, %v1157, 0
    %1160 = vmatpush.msra.mxu0 0.0
    %1161 = vmatpush.msra.mxu0 0.0
    %1162 = vmatpush.msra.mxu0 0.0
    %1163 = vmatpush.msra.mxu0 0.0
    %1164 = vmatpush.msra.mxu0 0.0
    %1165 = vmatpush.msra.mxu0 0.0
    %1166 = vmatpush.msra.mxu0 0.0
    %1167 = vmatpush.msra.mxu0 0.0
    %1168 = vmatpush.msra.mxu0 %v115
    %1169 = vmatpush.msra.mxu0 %v114
    %1170 = vmatpush.msra.mxu0 %v113
    %1171 = vmatpush.msra.mxu0 %v112
    %1172 = vmatpush.msra.mxu0 %v111
    %1173 = vmatpush.msra.mxu0 %v110
    %1174 = vmatpush.msra.mxu0 %v109
    %1175 = vmatpush.msra.mxu0 %v108
    %1176 = vmatmul.f32.gmra.mxu0 %v1158
    %v1177 = vpop.f32.mrf.mxu0
    %v1178 = vadd.f32 %v185, %v1177
    %1179 = vdwg.mxu0
    %v1180 = vxor.u32 %v1178, 2147483648
    %v1181 = vmul.f32 %v1180, 1.442695
    %v1182 = vpow.pop %v1181
    %v1183 = vadd.f32 %v1182, 1.0
    %v1184 = vrcp.pop %v1183
    %v1185 = vmul.f32 %v1183, %v1184
    %v1186 = vsub.f32 1.0, %v1185
    %v1187 = vmul.f32 %v1184, %v1186
    %v1188 = vadd.f32 %v1184, %v1187
    %vm1189 = vweird.f32 %v1183
    %vm1190 = vweird.f32 %v1184
    %vm1191 = vmor %vm1189, %vm1190
    %v1192 = vsel %vm1191, %v1184, %v1188
    %v1193 = vand.u32 2147483647, %v1183
    %vm1194 = vcmp.eq.f32.partialorder %v1193, 8.507059e+37
    %v1195 = vand.u32 %v1183, 2147483648
    %v1196 = vor.u32 1.1754944e-38, %v1195
    %v1197 = vsel %vm1194, %v1196, %v1192
    %v1198 = vmul.f32 1.0, %v1197
    %v1199 = vtanh.pop %v1178
    %v1200 = vmul.f32 %v1198, %v1070
    %1202 = vrot.lane.b32.xlu0 %v1199, 64
    %v1203 = vpop.permute.xlu0 %1202
    %v1205 = vmul.f32 %v1198, %v1203
    %1207 = vrot.lane.b32.xlu0 %v1205, 32
    %v1208 = vpop.permute.xlu0 %1207
    %v1210 = vadd.f32 %v1200, %v1208
    %v1211 = vtanh.pop %v1210
    %1213 = vrot.lane.b32.xlu0 %v1211, 64
    %v1214 = vpop.permute.xlu0 %1213
    %v1216 = vmul.f32 %v1198, %v1214
    %v1217 = vld [vmem:[%s6] sm:$0x1]
    %v1219 = vperm.slane %v1217, 0
    %1220 = vrot.lane.b32.xlu0 %v1219, 96
    %v1221 = vpop.permute.xlu0 %1220
    %v1223 = vmul.f32 %v1216, %v1221
    %1225 = vrot.lane.b32.xlu0 %v1223, 32
    %v1226 = vpop.permute.xlu0 %1225
    %vm1228 = vcmask 254976
    %v1229 = vsel %vm1228, %v1226, 0.0
    %1230 = vadd.xlane.f32.xlu0 %v1229
    %v1231 = vpop.xlane.xlu0 %1230
    %v1232 = vld [vmem:[#allocation2] sm:$0x1]
    %v1234 = vperm.slane %v1232, 0
    %v1236 = vadd.f32 %v1231, %v1234
    %vm1237 = vcmask 1024
    %1238 = vst.msk [vmem:[%s8] sm:$0x3] %vm1237, %v1236
    // Predicated region
    $region42: #{lstm_forward.1} parent=1 // pred_check
      _
    $region43: #{lstm_forward.1} parent=1 // pred_check_branch
      %1240 = sbr.rel (0) target = $region45
    $region44: #{lstm_forward.1} parent=1 // pred_region
      _
    $region45: #{lstm_forward.1} parent=1 // pred_fallthru
      _
    // Predicated region
    $region46: #{lstm_forward.1} parent=1 // pred_check
      _
    $region47: #{lstm_forward.1} parent=1 // pred_check_branch
      %1242 = sbr.rel (0) target = $region49
    $region48: #{lstm_forward.1} parent=1 // pred_region
      _
    $region49: #{lstm_forward.1} parent=1 // pred_fallthru
      _
    %1243 = vsyncpa [#allocation4], 1
    %1244 = vsyncpa [#allocation6], 1

</llo_original>
